<compile_context>
chip_gen: v7x
topology: tpu7x:2x2x1
jax: 0.10.0
libtpu: 0.0.40
codegen_flags: <defaults>
</compile_context>

<pallas_src>
import functools

import jax
import jax.numpy as jnp
from jax.experimental import pallas as pl
from jax.experimental.pallas import tpu as pltpu


# ------------------------------- fused kernel --------------------------------


def _emission_kernel(x_ref,
                     w1_ref, b1_ref, w2_ref, b2_ref,
                     w3m_ref, w3eo_ref, b3_ref,
                     w4_ref, b4_ref, w5_ref, b5_ref,
                     wf1_ref, bf1_ref, wf2_ref, bf2_ref,
                     wf3_ref, bf3_ref, wf4_ref, bf4_ref,
                     wh_ref, bh_ref,
                     out_ref,
                     *, seq_len, x_dim, clamp_min, clamp_max):
    """Full EmissionConv forward for a block of rows = bb*seq_len flattened
    (batch, time) rows.  Blocks hold whole sequences, so per-sequence conv
    boundaries are enforced with (row % seq_len) masks on the time shifts."""
    rows = x_ref.shape[0]
    mxu_dtype = w1_ref.dtype

    row = jax.lax.broadcasted_iota(jnp.int32, (rows, 1), 0)
    is_last = (row % seq_len) == (seq_len - 1)   # t == T-1 inside its sequence
    is_first = (row % seq_len) == 0              # t == 0

    # Time shifts as XLU sublane rotations + boundary masks (kept on f32 data;
    # the XLU slot is otherwise idle in this kernel).
    def shift_up(h):    # y[t] = h[t+1], zero at t == T-1 (per sequence)
        y = pltpu.roll(h, shift=rows - 1, axis=0)       # == roll by -1
        return jnp.where(is_last, jnp.zeros_like(y), y)

    def shift_down(h):  # y[t] = h[t-1], zero at t == 0 (per sequence)
        y = pltpu.roll(h, shift=1, axis=0)
        return jnp.where(is_first, jnp.zeros_like(y), y)

    def mmb(a, w_ref):  # bf16 (or f32) MXU operands, f32 accumulation
        return jnp.dot(a.astype(mxu_dtype), w_ref[...],
                       preferred_element_type=jnp.float32)

    def conv_same(h, wf_ref, b_ref):
        # ConvTranspose1d(k=3, s=1, p=1) == same-length conv; taps fused
        # im2col-style into one K=3*Cin matmul:
        #   y[t] = [h[t+1] | h[t] | h[t-1]] @ [W0; W1; W2] + b
        taps = jnp.concatenate([shift_up(h), h, shift_down(h)], axis=-1)
        return mmb(taps, wf_ref) + b_ref[...]

    # Input arrives in mxu_dtype (halved DMA); up-cast once so the rolls and
    # all elementwise/residual work stay 32-bit (v5e-safe VPU path).
    x = x_ref[...].astype(jnp.float32)

    # conv1 / conv2 (+ residual)
    h = jax.nn.relu(conv_same(x, w1_ref, b1_ref))
    h = jax.nn.relu(conv_same(h, w2_ref, b2_ref)) + h

    # conv3: ConvTranspose1d(k=3, s=2, p=1, output_padding=1) -> 2x upsample,
    # kept folded as (even, odd) streams of length T:
    #   even[j] = h[j] @ W1 + b ;  odd[j] = h[j+1] @ W0 + h[j] @ W2 + b
    b3 = b3_ref[...]
    e = jax.nn.relu(mmb(h, w3m_ref) + b3)
    o = jax.nn.relu(mmb(jnp.concatenate([shift_up(h), h], axis=-1),
                        w3eo_ref) + b3)

    # conv4 / conv5 on the folded representation (+ residual).  For the
    # interleaved sequence g[2j]=e[j], g[2j+1]=o[j], a same-length conv is
    #   y[2j]   = o[j]   @ W0 + e[j] @ W1 + o[j-1] @ W2
    #   y[2j+1] = e[j+1] @ W0 + o[j] @ W1 + e[j]   @ W2
    # Both tap matrices are row-stacked so each layer is ONE matmul.
    def conv_folded(e, o, wf_ref, b_ref):
        taps = jnp.concatenate(
            [jnp.concatenate([o, e, shift_down(o)], axis=-1),
             jnp.concatenate([shift_up(e), o, e], axis=-1)], axis=0)
        y = jax.nn.relu(mmb(taps, wf_ref) + b_ref[...])
        return y[:rows] + e, y[rows:] + o

    e, o = conv_folded(e, o, w4_ref, b4_ref)
    e, o = conv_folded(e, o, w5_ref, b5_ref)

    # Residual FC stack + fused (mu | logvar) head, run ONCE on the
    # row-stacked streams [e ; o].
    h = jnp.concatenate([e, o], axis=0)                 # [2*rows, hid]
    for w_ref, b_ref in ((wf1_ref, bf1_ref), (wf2_ref, bf2_ref),
                         (wf3_ref, bf3_ref), (wf4_ref, bf4_ref)):
        h = jax.nn.relu(mmb(h, w_ref) + b_ref[...]) + h
    y = mmb(h, wh_ref) + bh_ref[...]                    # [2*rows, head_lanes]

    # Clamp logvar lanes only (mask built once); head columns beyond 2*x_dim
    # are zero padding from the pre-padded head weights.
    lane = jax.lax.broadcasted_iota(jnp.int32, y.shape, 1)
    y = jnp.where((lane >= x_dim) & (lane < 2 * x_dim),
                  jnp.clip(y, clamp_min, clamp_max), y)

    # Lane-dense output row (last dim a multiple of 128 -> unmasked vst):
    #   [ mu_e | lv_e | pad | mu_o | lv_o | pad ]
    # The even/odd time interleave is a free row-major reshape in the wrapper.
    out_ref[...] = jnp.concatenate([y[:rows], y[rows:]],
                                   axis=-1).astype(out_ref.dtype)


# ------------------------------ wrapper (glue) --------------------------------


_FUSED_ORDER = ("w1", "b1", "w2", "b2", "w3m", "w3eo", "b3", "w4", "b4",
                "w5", "b5", "wf1", "bf1", "wf2", "bf2", "wf3", "bf3",
                "wf4", "bf4", "wh", "bh")


def _fuse_params(params, mxu_dtype, head_lanes):
    """Fuse conv taps and the mu|logvar head (zero-padded to head_lanes columns
    for a lane-dense output); cast matmul weights to mxu_dtype."""
    def taps(w):   # [3, cin, cout] -> [3*cin, cout] == [W0; W1; W2]
        return w.reshape(-1, w.shape[-1]).astype(mxu_dtype)

    xd = params["wmu"].shape[-1]
    wh = jnp.concatenate([params["wmu"], params["wlv"]], axis=1)   # [hid, 2*xd]
    bh = jnp.concatenate([params["bmu"], params["blv"]], axis=1)
    pad = head_lanes - 2 * xd
    if pad:
        wh = jnp.pad(wh, ((0, 0), (0, pad)))
        bh = jnp.pad(bh, ((0, 0), (0, pad)))

    f = {
        "w1": taps(params["w1"]), "b1": params["b1"].astype(jnp.float32),
        "w2": taps(params["w2"]), "b2": params["b2"].astype(jnp.float32),
        # stride-2 conv: middle tap -> even outputs, taps (0, 2) -> odd outputs.
        "w3m": params["w3"][1].astype(mxu_dtype),
        "w3eo": jnp.concatenate([params["w3"][0], params["w3"][2]],
                                axis=0).astype(mxu_dtype),
        "b3": params["b3"].astype(jnp.float32),
        "w4": taps(params["w4"]), "b4": params["b4"].astype(jnp.float32),
        "w5": taps(params["w5"]), "b5": params["b5"].astype(jnp.float32),
        "wh": wh.astype(mxu_dtype), "bh": bh.astype(jnp.float32),
    }
    for i in range(1, 5):
        f[f"wf{i}"] = params[f"wf{i}"].astype(mxu_dtype)
        f[f"bf{i}"] = params[f"bf{i}"].astype(jnp.float32)
    return [f[k] for k in _FUSED_ORDER]


def _tpu_generation():
    try:
        kind = jax.devices()[0].device_kind.lower()
    except Exception:
        return "unknown"
    if "v5e" in kind or "v5 lite" in kind or "v5lite" in kind:
        return "v5e"
    if "v6" in kind:
        return "v6e"
    if "v7" in kind or "7x" in kind:
        return "v7x"
    return "unknown"


# Scoped-VMEM budget requested per generation.  v5e's scoped DEFAULT is only
# 16 MiB (physical 128 MiB) so the limit is made explicit; v7x has 64 MiB per
# TensorCore total, so stay at its 32 MiB scoped default.
_VMEM_BUDGET = {"v5e": 64 << 20, "v6e": 64 << 20, "v7x": 32 << 20}
_ROW_CAP = {"v5e": 2048, "v6e": 4096, "v7x": 2048}


def _target_rows(gen, cin, hid, out_lanes, vmem_budget):
    """Largest per-step row count that comfortably fits the VMEM budget."""
    # Per-row live bytes: double-buffered bf16 input + f32 output blocks plus
    # f32 in-kernel temporaries (row-stacked taps + activation carries), with
    # a 2x margin for compiler scratch.
    per_row = 2 * (2 * cin + 4 * out_lanes) + 4 * (16 * hid)
    rows = int(vmem_budget // (2 * per_row))
    rows = min(rows, _ROW_CAP.get(gen, 1024))
    return max(8, (rows // 8) * 8)


def _pick_rows_per_block(batch, seq_len, target_rows, min_grid_steps):
    """Rows (= bb*seq_len, bb | batch) per grid step.

    Blocks hold whole sequences (required by the per-sequence shift masks) and
    block rows stay a multiple of 8 (sublane tile).  min_grid_steps=2 only on
    v7x so its two TensorCores each get an equal share of the "parallel" grid;
    v5e/v6e are single-core, so the largest fitting block wins.
    """
    candidates = []
    for bb in range(1, batch + 1):
        if batch % bb:
            continue
        rows, steps = bb * seq_len, batch // bb
        if rows % 8 != 0 and bb != batch:
            continue
        if rows > target_rows:
            continue
        if steps < min_grid_steps:
            continue
        if min_grid_steps > 1 and steps % min_grid_steps:
            continue
        candidates.append(rows)
    if candidates:
        return max(candidates)
    # Fallback: drop the multi-core constraint, keep alignment / size cap.
    for bb in range(batch, 0, -1):
        if batch % bb == 0 and (bb == batch or (bb * seq_len) % 8 == 0) \
                and bb * seq_len <= target_rows:
            return bb * seq_len
    return batch * seq_len


def emission_conv_forward(v, u, lengths, params, clamp_min=-5.0, clamp_max=5.0,
                          mxu_dtype=jnp.bfloat16):
    del lengths  # unused in the reference PyTorch forward as well
    B, T, _ = v.shape
    xd = params["wmu"].shape[-1]
    hid = params["wf1"].shape[0]

    # Lane-dense output: 2 streams x head_lanes, last dim a multiple of 128.
    out_lanes = pl.cdiv(4 * xd, 128) * 128
    head_lanes = out_lanes // 2

    vu = jnp.concatenate([v, u], axis=-1)                   # [B, T, cin]
    cin = vu.shape[-1]
    x2 = vu.reshape(B * T, cin).astype(mxu_dtype)           # bf16 input DMA

    weights = _fuse_params(params, mxu_dtype, head_lanes)

    gen = _tpu_generation()
    vmem_limit = _VMEM_BUDGET.get(gen, 32 << 20)
    min_steps = 2 if gen == "v7x" else 1
    rows = _pick_rows_per_block(
        B, T, _target_rows(gen, cin, hid, out_lanes, vmem_limit), min_steps)

    kernel = functools.partial(
        _emission_kernel, seq_len=T, x_dim=xd,
        clamp_min=float(clamp_min), clamp_max=float(clamp_max))

    out = pl.pallas_call(
        kernel,
        out_shape=jax.ShapeDtypeStruct((B * T, out_lanes), jnp.float32),
        grid=((B * T) // rows,),
        in_specs=[pl.BlockSpec((rows, cin), lambda i: (i, 0))]
        # Weights/biases have constant index maps: DMA'd to VMEM once and kept
        # single-buffered (double-buffering a constant block is pure waste).
        + [pl.BlockSpec(w.shape, lambda i: (0, 0),
                        pipeline_mode=pl.Buffered(1)) for w in weights],
        out_specs=pl.BlockSpec((rows, out_lanes), lambda i: (i, 0)),
        compiler_params=pltpu.CompilerParams(
            dimension_semantics=("parallel",),
            vmem_limit_bytes=vmem_limit),
    )(x2, *weights)

    # [B*T, (mu_e|lv_e|pad)(mu_o|lv_o|pad)] -> [B, 2T, head_lanes]: the
    # even/odd time interleave is a free row-major reshape; mu/logvar are
    # lane slices.
    out = out.reshape(B, 2 * T, head_lanes)
    return out[..., :xd], out[..., xd:2 * xd]


# ---------------------------- pure-JAX reference ------------------------------


def _mm(a, b):
    return jnp.dot(a, b, precision=jax.lax.Precision.HIGHEST)


def _ref_convT(x, w, b, stride, padding, output_padding):
    # Direct translation of PyTorch ConvTranspose1d (channel-last layout).
    B, T, _ = x.shape
    k, _, cout = w.shape
    lout = (T - 1) * stride - 2 * padding + k + output_padding
    y = jnp.zeros((B, lout, cout), jnp.float32)
    for i in range(T):
        for kk in range(k):
            o = i * stride - padding + kk
            if 0 <= o < lout:
                y = y.at[:, o, :].add(_mm(x[:, i, :], w[kk]))
    return y + b


def _ref_forward(v, u, p, cmin, cmax):
    h = jnp.concatenate([v, u], axis=-1)
    h = jax.nn.relu(_ref_convT(h, p["w1"], p["b1"], 1, 1, 0))
    h = jax.nn.relu(_ref_convT(h, p["w2"], p["b2"], 1, 1, 0)) + h
    h = jax.nn.relu(_ref_convT(h, p["w3"], p["b3"], 2, 1, 1))
    h = jax.nn.relu(_ref_convT(h, p["w4"], p["b4"], 1, 1, 0)) + h
    h = jax.nn.relu(_ref_convT(h, p["w5"], p["b5"], 1, 1, 0)) + h
    for i in range(1, 5):
        h = jax.nn.relu(_mm(h, p[f"wf{i}"]) + p[f"bf{i}"]) + h
    mu = _mm(h, p["wmu"]) + p["bmu"]
    lv = jnp.clip(_mm(h, p["wlv"]) + p["blv"], cmin, cmax)
    return mu, lv


# ----------------------------------- main --------------------------------------


def _init_params(key, cin, hid, xd):
    params = {}
    names_shapes = [
        ("w1", (3, cin, hid)), ("b1", (1, hid)),
        ("w2", (3, hid, hid)), ("b2", (1, hid)),
        ("w3", (3, hid, hid)), ("b3", (1, hid)),
        ("w4", (3, hid, hid)), ("b4", (1, hid)),
        ("w5", (3, hid, hid)), ("b5", (1, hid)),
        ("wf1", (hid, hid)), ("bf1", (1, hid)),
        ("wf2", (hid, hid)), ("bf2", (1, hid)),
        ("wf3", (hid, hid)), ("bf3", (1, hid)),
        ("wf4", (hid, hid)), ("bf4", (1, hid)),
        ("wmu", (hid, xd)), ("bmu", (1, xd)),
        ("wlv", (hid, xd)), ("blv", (1, xd)),
    ]
    keys = jax.random.split(key, len(names_shapes))
    for k, (name, shape) in zip(keys, names_shapes):
        params[name] = (0.1 * jax.random.normal(k, shape)).astype(jnp.float32)
    return params


if __name__ == "__main__":
    B, T = 2, 8
    v_dim, u_dim, hid_dim, x_dim = 8, 8, 32, 16

    key = jax.random.PRNGKey(0)
    kv, ku, kp = jax.random.split(key, 3)
    v = jax.random.normal(kv, (B, T, v_dim), jnp.float32)
    u = jax.random.normal(ku, (B, T, u_dim), jnp.float32)
    lengths = jnp.full((B,), T, jnp.int32)  # unused (matches PyTorch forward)
    params = _init_params(kp, v_dim + u_dim, hid_dim, x_dim)

    mu_ref, lv_ref = _ref_forward(v, u, params, -5.0, 5.0)

    # f32-MXU path: tight structural check against the HIGHEST-precision ref.
    mu32, lv32 = jax.block_until_ready(
        emission_conv_forward(v, u, lengths, params, mxu_dtype=jnp.float32))
    assert mu32.shape == (B, 2 * T, x_dim) and lv32.shape == (B, 2 * T, x_dim)
    assert jnp.allclose(mu32, mu_ref, atol=1e-3, rtol=1e-3)
    assert jnp.allclose(lv32, lv_ref, atol=1e-3, rtol=1e-3)

    # bf16-MXU path (the performance default): looser tolerance accounts for
    # bf16 operand rounding (accumulation and elementwise work stay f32).
    mu, logvar = jax.block_until_ready(
        emission_conv_forward(v, u, lengths, params))
    assert mu.shape == (B, 2 * T, x_dim) and logvar.shape == (B, 2 * T, x_dim)
    assert jnp.allclose(mu, mu_ref, atol=1e-1, rtol=1e-1)
    assert jnp.allclose(logvar, lv_ref, atol=1e-1, rtol=1e-1)

    print("KERNEL_OK")
</pallas_src>

<mosaic_0001>
module attributes {stable_mosaic.version = 11 : i64} {
  func.func @_emission_kernel(%arg0: i32, %arg1: memref<16x16xf32, #tpu.memory_space<vmem>>, %arg2: memref<48x32xf32, #tpu.memory_space<vmem>>, %arg3: memref<1x32xf32, #tpu.memory_space<vmem>>, %arg4: memref<96x32xf32, #tpu.memory_space<vmem>>, %arg5: memref<1x32xf32, #tpu.memory_space<vmem>>, %arg6: memref<32x32xf32, #tpu.memory_space<vmem>>, %arg7: memref<64x32xf32, #tpu.memory_space<vmem>>, %arg8: memref<1x32xf32, #tpu.memory_space<vmem>>, %arg9: memref<96x32xf32, #tpu.memory_space<vmem>>, %arg10: memref<1x32xf32, #tpu.memory_space<vmem>>, %arg11: memref<96x32xf32, #tpu.memory_space<vmem>>, %arg12: memref<1x32xf32, #tpu.memory_space<vmem>>, %arg13: memref<32x32xf32, #tpu.memory_space<vmem>>, %arg14: memref<1x32xf32, #tpu.memory_space<vmem>>, %arg15: memref<32x32xf32, #tpu.memory_space<vmem>>, %arg16: memref<1x32xf32, #tpu.memory_space<vmem>>, %arg17: memref<32x32xf32, #tpu.memory_space<vmem>>, %arg18: memref<1x32xf32, #tpu.memory_space<vmem>>, %arg19: memref<32x32xf32, #tpu.memory_space<vmem>>, %arg20: memref<1x32xf32, #tpu.memory_space<vmem>>, %arg21: memref<32x64xf32, #tpu.memory_space<vmem>>, %arg22: memref<1x64xf32, #tpu.memory_space<vmem>>, %arg23: memref<16x128xf32, #tpu.memory_space<vmem>>) attributes {dimension_semantics = [#tpu.dimension_semantics<parallel>], iteration_bounds = array<i64: 1>, scalar_prefetch = 0 : i64, scratch_operands = 0 : i64, tpu.core_type = #tpu.core_type<tc>, window_params = [{transform_indices = @transform_0, window_bounds = array<i64: 16, 16>}, {pipeline_mode = #tpu.pipeline_mode<synchronous>, transform_indices = @transform_1, window_bounds = array<i64: 48, 32>}, {pipeline_mode = #tpu.pipeline_mode<synchronous>, transform_indices = @transform_2, window_bounds = array<i64: 1, 32>}, {pipeline_mode = #tpu.pipeline_mode<synchronous>, transform_indices = @transform_3, window_bounds = array<i64: 96, 32>}, {pipeline_mode = #tpu.pipeline_mode<synchronous>, transform_indices = @transform_4, window_bounds = array<i64: 1, 32>}, {pipeline_mode = #tpu.pipeline_mode<synchronous>, transform_indices = @transform_5, window_bounds = array<i64: 32, 32>}, {pipeline_mode = #tpu.pipeline_mode<synchronous>, transform_indices = @transform_6, window_bounds = array<i64: 64, 32>}, {pipeline_mode = #tpu.pipeline_mode<synchronous>, transform_indices = @transform_7, window_bounds = array<i64: 1, 32>}, {pipeline_mode = #tpu.pipeline_mode<synchronous>, transform_indices = @transform_8, window_bounds = array<i64: 96, 32>}, {pipeline_mode = #tpu.pipeline_mode<synchronous>, transform_indices = @transform_9, window_bounds = array<i64: 1, 32>}, {pipeline_mode = #tpu.pipeline_mode<synchronous>, transform_indices = @transform_10, window_bounds = array<i64: 96, 32>}, {pipeline_mode = #tpu.pipeline_mode<synchronous>, transform_indices = @transform_11, window_bounds = array<i64: 1, 32>}, {pipeline_mode = #tpu.pipeline_mode<synchronous>, transform_indices = @transform_12, window_bounds = array<i64: 32, 32>}, {pipeline_mode = #tpu.pipeline_mode<synchronous>, transform_indices = @transform_13, window_bounds = array<i64: 1, 32>}, {pipeline_mode = #tpu.pipeline_mode<synchronous>, transform_indices = @transform_14, window_bounds = array<i64: 32, 32>}, {pipeline_mode = #tpu.pipeline_mode<synchronous>, transform_indices = @transform_15, window_bounds = array<i64: 1, 32>}, {pipeline_mode = #tpu.pipeline_mode<synchronous>, transform_indices = @transform_16, window_bounds = array<i64: 32, 32>}, {pipeline_mode = #tpu.pipeline_mode<synchronous>, transform_indices = @transform_17, window_bounds = array<i64: 1, 32>}, {pipeline_mode = #tpu.pipeline_mode<synchronous>, transform_indices = @transform_18, window_bounds = array<i64: 32, 32>}, {pipeline_mode = #tpu.pipeline_mode<synchronous>, transform_indices = @transform_19, window_bounds = array<i64: 1, 32>}, {pipeline_mode = #tpu.pipeline_mode<synchronous>, transform_indices = @transform_20, window_bounds = array<i64: 32, 64>}, {pipeline_mode = #tpu.pipeline_mode<synchronous>, transform_indices = @transform_21, window_bounds = array<i64: 1, 64>}, {transform_indices = @transform_22, window_bounds = array<i64: 16, 128>}]} {
    %0 = tpu.iota {dimensions = array<i32: 0>} : vector<16x1xi32>
    %c8_i32 = arith.constant 8 : i32
    %c0_i32 = arith.constant 0 : i32
    %1 = arith.cmpi eq, %c8_i32, %c0_i32 : i32
    %c1_i32 = arith.constant 1 : i32
    %2 = arith.select %1, %c1_i32, %c8_i32 : i32
    %3 = vector.broadcast %2 : i32 to vector<16x1xi32>
    %4 = arith.remsi %0, %3 : vector<16x1xi32>
    %c0_i32_0 = arith.constant 0 : i32
    %5 = vector.broadcast %c0_i32_0 : i32 to vector<16x1xi32>
    %6 = arith.cmpi ne, %4, %5 : vector<16x1xi32>
    %c0_i32_1 = arith.constant 0 : i32
    %7 = vector.broadcast %c0_i32_1 : i32 to vector<16x1xi32>
    %8 = arith.cmpi slt, %4, %7 : vector<16x1xi32>
    %c0_i32_2 = arith.constant 0 : i32
    %9 = arith.cmpi slt, %2, %c0_i32_2 : i32
    %10 = vector.broadcast %9 : i1 to vector<16x1xi1>
    %11 = vector.broadcast %10 : vector<16x1xi1> to vector<16x1xi1>
    %12 = arith.xori %8, %11 : vector<16x1xi1>
    %13 = arith.andi %12, %6 : vector<16x1xi1>
    %14 = vector.broadcast %2 : i32 to vector<16x1xi32>
    %15 = arith.addi %4, %14 : vector<16x1xi32>
    %16 = arith.select %13, %15, %4 : vector<16x1xi1>, vector<16x1xi32>
    %c7_i32 = arith.constant 7 : i32
    %17 = vector.broadcast %c7_i32 : i32 to vector<16x1xi32>
    %18 = arith.cmpi eq, %16, %17 : vector<16x1xi32>
    %c8_i32_3 = arith.constant 8 : i32
    %c0_i32_4 = arith.constant 0 : i32
    %19 = arith.cmpi eq, %c8_i32_3, %c0_i32_4 : i32
    %c1_i32_5 = arith.constant 1 : i32
    %20 = arith.select %19, %c1_i32_5, %c8_i32_3 : i32
    %21 = vector.broadcast %20 : i32 to vector<16x1xi32>
    %22 = arith.remsi %0, %21 : vector<16x1xi32>
    %c0_i32_6 = arith.constant 0 : i32
    %23 = vector.broadcast %c0_i32_6 : i32 to vector<16x1xi32>
    %24 = arith.cmpi ne, %22, %23 : vector<16x1xi32>
    %c0_i32_7 = arith.constant 0 : i32
    %25 = vector.broadcast %c0_i32_7 : i32 to vector<16x1xi32>
    %26 = arith.cmpi slt, %22, %25 : vector<16x1xi32>
    %c0_i32_8 = arith.constant 0 : i32
    %27 = arith.cmpi slt, %20, %c0_i32_8 : i32
    %28 = vector.broadcast %27 : i1 to vector<16x1xi1>
    %29 = vector.broadcast %28 : vector<16x1xi1> to vector<16x1xi1>
    %30 = arith.xori %26, %29 : vector<16x1xi1>
    %31 = arith.andi %30, %24 : vector<16x1xi1>
    %32 = vector.broadcast %20 : i32 to vector<16x1xi32>
    %33 = arith.addi %22, %32 : vector<16x1xi32>
    %34 = arith.select %31, %33, %22 : vector<16x1xi1>, vector<16x1xi32>
    %c0_i32_9 = arith.constant 0 : i32
    %35 = vector.broadcast %c0_i32_9 : i32 to vector<16x1xi32>
    %36 = arith.cmpi eq, %34, %35 : vector<16x1xi32>
    %c0 = arith.constant 0 : index
    %c0_10 = arith.constant 0 : index
    %37 = vector.load %arg1[%c0, %c0_10] : memref<16x16xf32, #tpu.memory_space<vmem>>, vector<16x16xf32>
    %c15_i32 = arith.constant 15 : i32
    %38 = tpu.dynamic_rotate %37 by %c15_i32 dim 0 : vector<16x16xf32>, i32 -> vector<16x16xf32>
    %cst = arith.constant 0.000000e+00 : f32
    %39 = vector.broadcast %cst : f32 to vector<16x16xf32>
    %40 = vector.shape_cast %18 : vector<16x1xi1> to vector<16x1xi1>
    %41 = vector.broadcast %40 : vector<16x1xi1> to vector<16x16xi1>
    %42 = arith.select %41, %39, %38 : vector<16x16xi1>, vector<16x16xf32>
    %c1_i32_11 = arith.constant 1 : i32
    %43 = tpu.dynamic_rotate %37 by %c1_i32_11 dim 0 : vector<16x16xf32>, i32 -> vector<16x16xf32>
    %cst_12 = arith.constant 0.000000e+00 : f32
    %44 = vector.broadcast %cst_12 : f32 to vector<16x16xf32>
    %45 = vector.shape_cast %36 : vector<16x1xi1> to vector<16x1xi1>
    %46 = vector.broadcast %45 : vector<16x1xi1> to vector<16x16xi1>
    %47 = arith.select %46, %44, %43 : vector<16x16xi1>, vector<16x16xf32>
    %48 = tpu.concatenate %42, %37, %47 in 1 : vector<16x16xf32>, vector<16x16xf32>, vector<16x16xf32> -> vector<16x48xf32>
    %c0_13 = arith.constant 0 : index
    %c0_14 = arith.constant 0 : index
    %49 = vector.load %arg2[%c0_13, %c0_14] : memref<48x32xf32, #tpu.memory_space<vmem>>, vector<48x32xf32>
    %cst_15 = arith.constant dense<0.000000e+00> : vector<16x32xf32>
    %50 = tpu.matmul %48, %49, %cst_15 {dimension_numbers = #tpu.dot_dimension_numbers<[1], [0], [0], [1], [0, 0, 1, 1], [], []>} : vector<16x48xf32>, vector<48x32xf32>, vector<16x32xf32> -> vector<16x32xf32>
    %c0_16 = arith.constant 0 : index
    %c0_17 = arith.constant 0 : index
    %51 = vector.load %arg3[%c0_16, %c0_17] : memref<1x32xf32, #tpu.memory_space<vmem>>, vector<1x32xf32>
    %52 = vector.broadcast %51 : vector<1x32xf32> to vector<16x32xf32>
    %53 = arith.addf %50, %52 : vector<16x32xf32>
    %cst_18 = arith.constant 0.000000e+00 : f32
    %54 = vector.broadcast %cst_18 : f32 to vector<16x32xf32>
    %55 = arith.maximumf %53, %54 : vector<16x32xf32>
    %c15_i32_19 = arith.constant 15 : i32
    %56 = tpu.dynamic_rotate %55 by %c15_i32_19 dim 0 : vector<16x32xf32>, i32 -> vector<16x32xf32>
    %cst_20 = arith.constant 0.000000e+00 : f32
    %57 = vector.broadcast %cst_20 : f32 to vector<16x32xf32>
    %58 = vector.shape_cast %18 : vector<16x1xi1> to vector<16x1xi1>
    %59 = vector.broadcast %58 : vector<16x1xi1> to vector<16x32xi1>
    %60 = arith.select %59, %57, %56 : vector<16x32xi1>, vector<16x32xf32>
    %c1_i32_21 = arith.constant 1 : i32
    %61 = tpu.dynamic_rotate %55 by %c1_i32_21 dim 0 : vector<16x32xf32>, i32 -> vector<16x32xf32>
    %cst_22 = arith.constant 0.000000e+00 : f32
    %62 = vector.broadcast %cst_22 : f32 to vector<16x32xf32>
    %63 = vector.shape_cast %36 : vector<16x1xi1> to vector<16x1xi1>
    %64 = vector.broadcast %63 : vector<16x1xi1> to vector<16x32xi1>
    %65 = arith.select %64, %62, %61 : vector<16x32xi1>, vector<16x32xf32>
    %66 = tpu.concatenate %60, %55, %65 in 1 : vector<16x32xf32>, vector<16x32xf32>, vector<16x32xf32> -> vector<16x96xf32>
    %c0_23 = arith.constant 0 : index
    %c0_24 = arith.constant 0 : index
    %67 = vector.load %arg4[%c0_23, %c0_24] : memref<96x32xf32, #tpu.memory_space<vmem>>, vector<96x32xf32>
    %cst_25 = arith.constant dense<0.000000e+00> : vector<16x32xf32>
    %68 = tpu.matmul %66, %67, %cst_25 {dimension_numbers = #tpu.dot_dimension_numbers<[1], [0], [0], [1], [0, 0, 1, 1], [], []>} : vector<16x96xf32>, vector<96x32xf32>, vector<16x32xf32> -> vector<16x32xf32>
    %c0_26 = arith.constant 0 : index
    %c0_27 = arith.constant 0 : index
    %69 = vector.load %arg5[%c0_26, %c0_27] : memref<1x32xf32, #tpu.memory_space<vmem>>, vector<1x32xf32>
    %70 = vector.broadcast %69 : vector<1x32xf32> to vector<16x32xf32>
    %71 = arith.addf %68, %70 : vector<16x32xf32>
    %cst_28 = arith.constant 0.000000e+00 : f32
    %72 = vector.broadcast %cst_28 : f32 to vector<16x32xf32>
    %73 = arith.maximumf %71, %72 : vector<16x32xf32>
    %74 = arith.addf %73, %55 : vector<16x32xf32>
    %c0_29 = arith.constant 0 : index
    %c0_30 = arith.constant 0 : index
    %75 = vector.load %arg8[%c0_29, %c0_30] : memref<1x32xf32, #tpu.memory_space<vmem>>, vector<1x32xf32>
    %c0_31 = arith.constant 0 : index
    %c0_32 = arith.constant 0 : index
    %76 = vector.load %arg6[%c0_31, %c0_32] : memref<32x32xf32, #tpu.memory_space<vmem>>, vector<32x32xf32>
    %cst_33 = arith.constant dense<0.000000e+00> : vector<16x32xf32>
    %77 = tpu.matmul %74, %76, %cst_33 {dimension_numbers = #tpu.dot_dimension_numbers<[1], [0], [0], [1], [0, 0, 1, 1], [], []>} : vector<16x32xf32>, vector<32x32xf32>, vector<16x32xf32> -> vector<16x32xf32>
    %78 = vector.broadcast %75 : vector<1x32xf32> to vector<16x32xf32>
    %79 = arith.addf %77, %78 : vector<16x32xf32>
    %cst_34 = arith.constant 0.000000e+00 : f32
    %80 = vector.broadcast %cst_34 : f32 to vector<16x32xf32>
    %81 = arith.maximumf %79, %80 : vector<16x32xf32>
    %c15_i32_35 = arith.constant 15 : i32
    %82 = tpu.dynamic_rotate %74 by %c15_i32_35 dim 0 : vector<16x32xf32>, i32 -> vector<16x32xf32>
    %cst_36 = arith.constant 0.000000e+00 : f32
    %83 = vector.broadcast %cst_36 : f32 to vector<16x32xf32>
    %84 = vector.shape_cast %18 : vector<16x1xi1> to vector<16x1xi1>
    %85 = vector.broadcast %84 : vector<16x1xi1> to vector<16x32xi1>
    %86 = arith.select %85, %83, %82 : vector<16x32xi1>, vector<16x32xf32>
    %87 = tpu.concatenate %86, %74 in 1 : vector<16x32xf32>, vector<16x32xf32> -> vector<16x64xf32>
    %c0_37 = arith.constant 0 : index
    %c0_38 = arith.constant 0 : index
    %88 = vector.load %arg7[%c0_37, %c0_38] : memref<64x32xf32, #tpu.memory_space<vmem>>, vector<64x32xf32>
    %cst_39 = arith.constant dense<0.000000e+00> : vector<16x32xf32>
    %89 = tpu.matmul %87, %88, %cst_39 {dimension_numbers = #tpu.dot_dimension_numbers<[1], [0], [0], [1], [0, 0, 1, 1], [], []>} : vector<16x64xf32>, vector<64x32xf32>, vector<16x32xf32> -> vector<16x32xf32>
    %90 = vector.broadcast %75 : vector<1x32xf32> to vector<16x32xf32>
    %91 = arith.addf %89, %90 : vector<16x32xf32>
    %cst_40 = arith.constant 0.000000e+00 : f32
    %92 = vector.broadcast %cst_40 : f32 to vector<16x32xf32>
    %93 = arith.maximumf %91, %92 : vector<16x32xf32>
    %c1_i32_41 = arith.constant 1 : i32
    %94 = tpu.dynamic_rotate %93 by %c1_i32_41 dim 0 : vector<16x32xf32>, i32 -> vector<16x32xf32>
    %cst_42 = arith.constant 0.000000e+00 : f32
    %95 = vector.broadcast %cst_42 : f32 to vector<16x32xf32>
    %96 = vector.shape_cast %36 : vector<16x1xi1> to vector<16x1xi1>
    %97 = vector.broadcast %96 : vector<16x1xi1> to vector<16x32xi1>
    %98 = arith.select %97, %95, %94 : vector<16x32xi1>, vector<16x32xf32>
    %99 = tpu.concatenate %93, %81, %98 in 1 : vector<16x32xf32>, vector<16x32xf32>, vector<16x32xf32> -> vector<16x96xf32>
    %c15_i32_43 = arith.constant 15 : i32
    %100 = tpu.dynamic_rotate %81 by %c15_i32_43 dim 0 : vector<16x32xf32>, i32 -> vector<16x32xf32>
    %cst_44 = arith.constant 0.000000e+00 : f32
    %101 = vector.broadcast %cst_44 : f32 to vector<16x32xf32>
    %102 = vector.shape_cast %18 : vector<16x1xi1> to vector<16x1xi1>
    %103 = vector.broadcast %102 : vector<16x1xi1> to vector<16x32xi1>
    %104 = arith.select %103, %101, %100 : vector<16x32xi1>, vector<16x32xf32>
    %105 = tpu.concatenate %104, %93, %81 in 1 : vector<16x32xf32>, vector<16x32xf32>, vector<16x32xf32> -> vector<16x96xf32>
    %106 = tpu.concatenate %99, %105 in 0 : vector<16x96xf32>, vector<16x96xf32> -> vector<32x96xf32>
    %c0_45 = arith.constant 0 : index
    %c0_46 = arith.constant 0 : index
    %107 = vector.load %arg9[%c0_45, %c0_46] : memref<96x32xf32, #tpu.memory_space<vmem>>, vector<96x32xf32>
    %cst_47 = arith.constant dense<0.000000e+00> : vector<32x32xf32>
    %108 = tpu.matmul %106, %107, %cst_47 {dimension_numbers = #tpu.dot_dimension_numbers<[1], [0], [0], [1], [0, 0, 1, 1], [], []>} : vector<32x96xf32>, vector<96x32xf32>, vector<32x32xf32> -> vector<32x32xf32>
    %c0_48 = arith.constant 0 : index
    %c0_49 = arith.constant 0 : index
    %109 = vector.load %arg10[%c0_48, %c0_49] : memref<1x32xf32, #tpu.memory_space<vmem>>, vector<1x32xf32>
    %110 = vector.broadcast %109 : vector<1x32xf32> to vector<32x32xf32>
    %111 = arith.addf %108, %110 : vector<32x32xf32>
    %cst_50 = arith.constant 0.000000e+00 : f32
    %112 = vector.broadcast %cst_50 : f32 to vector<32x32xf32>
    %113 = arith.maximumf %111, %112 : vector<32x32xf32>
    %114 = vector.extract_strided_slice %113 {offsets = [0, 0], sizes = [16, 32], strides = [1, 1]} : vector<32x32xf32> to vector<16x32xf32>
    %115 = arith.addf %114, %81 : vector<16x32xf32>
    %116 = vector.extract_strided_slice %113 {offsets = [16, 0], sizes = [16, 32], strides = [1, 1]} : vector<32x32xf32> to vector<16x32xf32>
    %117 = arith.addf %116, %93 : vector<16x32xf32>
    %c1_i32_51 = arith.constant 1 : i32
    %118 = tpu.dynamic_rotate %117 by %c1_i32_51 dim 0 : vector<16x32xf32>, i32 -> vector<16x32xf32>
    %cst_52 = arith.constant 0.000000e+00 : f32
    %119 = vector.broadcast %cst_52 : f32 to vector<16x32xf32>
    %120 = vector.shape_cast %36 : vector<16x1xi1> to vector<16x1xi1>
    %121 = vector.broadcast %120 : vector<16x1xi1> to vector<16x32xi1>
    %122 = arith.select %121, %119, %118 : vector<16x32xi1>, vector<16x32xf32>
    %123 = tpu.concatenate %117, %115, %122 in 1 : vector<16x32xf32>, vector<16x32xf32>, vector<16x32xf32> -> vector<16x96xf32>
    %c15_i32_53 = arith.constant 15 : i32
    %124 = tpu.dynamic_rotate %115 by %c15_i32_53 dim 0 : vector<16x32xf32>, i32 -> vector<16x32xf32>
    %cst_54 = arith.constant 0.000000e+00 : f32
    %125 = vector.broadcast %cst_54 : f32 to vector<16x32xf32>
    %126 = vector.shape_cast %18 : vector<16x1xi1> to vector<16x1xi1>
    %127 = vector.broadcast %126 : vector<16x1xi1> to vector<16x32xi1>
    %128 = arith.select %127, %125, %124 : vector<16x32xi1>, vector<16x32xf32>
    %129 = tpu.concatenate %128, %117, %115 in 1 : vector<16x32xf32>, vector<16x32xf32>, vector<16x32xf32> -> vector<16x96xf32>
    %130 = tpu.concatenate %123, %129 in 0 : vector<16x96xf32>, vector<16x96xf32> -> vector<32x96xf32>
    %c0_55 = arith.constant 0 : index
    %c0_56 = arith.constant 0 : index
    %131 = vector.load %arg11[%c0_55, %c0_56] : memref<96x32xf32, #tpu.memory_space<vmem>>, vector<96x32xf32>
    %cst_57 = arith.constant dense<0.000000e+00> : vector<32x32xf32>
    %132 = tpu.matmul %130, %131, %cst_57 {dimension_numbers = #tpu.dot_dimension_numbers<[1], [0], [0], [1], [0, 0, 1, 1], [], []>} : vector<32x96xf32>, vector<96x32xf32>, vector<32x32xf32> -> vector<32x32xf32>
    %c0_58 = arith.constant 0 : index
    %c0_59 = arith.constant 0 : index
    %133 = vector.load %arg12[%c0_58, %c0_59] : memref<1x32xf32, #tpu.memory_space<vmem>>, vector<1x32xf32>
    %134 = vector.broadcast %133 : vector<1x32xf32> to vector<32x32xf32>
    %135 = arith.addf %132, %134 : vector<32x32xf32>
    %cst_60 = arith.constant 0.000000e+00 : f32
    %136 = vector.broadcast %cst_60 : f32 to vector<32x32xf32>
    %137 = arith.maximumf %135, %136 : vector<32x32xf32>
    %138 = vector.extract_strided_slice %137 {offsets = [0, 0], sizes = [16, 32], strides = [1, 1]} : vector<32x32xf32> to vector<16x32xf32>
    %139 = arith.addf %138, %115 : vector<16x32xf32>
    %140 = vector.extract_strided_slice %137 {offsets = [16, 0], sizes = [16, 32], strides = [1, 1]} : vector<32x32xf32> to vector<16x32xf32>
    %141 = arith.addf %140, %117 : vector<16x32xf32>
    %142 = tpu.concatenate %139, %141 in 0 : vector<16x32xf32>, vector<16x32xf32> -> vector<32x32xf32>
    %c0_61 = arith.constant 0 : index
    %c0_62 = arith.constant 0 : index
    %143 = vector.load %arg13[%c0_61, %c0_62] : memref<32x32xf32, #tpu.memory_space<vmem>>, vector<32x32xf32>
    %cst_63 = arith.constant dense<0.000000e+00> : vector<32x32xf32>
    %144 = tpu.matmul %142, %143, %cst_63 {dimension_numbers = #tpu.dot_dimension_numbers<[1], [0], [0], [1], [0, 0, 1, 1], [], []>} : vector<32x32xf32>, vector<32x32xf32>, vector<32x32xf32> -> vector<32x32xf32>
    %c0_64 = arith.constant 0 : index
    %c0_65 = arith.constant 0 : index
    %145 = vector.load %arg14[%c0_64, %c0_65] : memref<1x32xf32, #tpu.memory_space<vmem>>, vector<1x32xf32>
    %146 = vector.broadcast %145 : vector<1x32xf32> to vector<32x32xf32>
    %147 = arith.addf %144, %146 : vector<32x32xf32>
    %cst_66 = arith.constant 0.000000e+00 : f32
    %148 = vector.broadcast %cst_66 : f32 to vector<32x32xf32>
    %149 = arith.maximumf %147, %148 : vector<32x32xf32>
    %150 = arith.addf %149, %142 : vector<32x32xf32>
    %c0_67 = arith.constant 0 : index
    %c0_68 = arith.constant 0 : index
    %151 = vector.load %arg15[%c0_67, %c0_68] : memref<32x32xf32, #tpu.memory_space<vmem>>, vector<32x32xf32>
    %cst_69 = arith.constant dense<0.000000e+00> : vector<32x32xf32>
    %152 = tpu.matmul %150, %151, %cst_69 {dimension_numbers = #tpu.dot_dimension_numbers<[1], [0], [0], [1], [0, 0, 1, 1], [], []>} : vector<32x32xf32>, vector<32x32xf32>, vector<32x32xf32> -> vector<32x32xf32>
    %c0_70 = arith.constant 0 : index
    %c0_71 = arith.constant 0 : index
    %153 = vector.load %arg16[%c0_70, %c0_71] : memref<1x32xf32, #tpu.memory_space<vmem>>, vector<1x32xf32>
    %154 = vector.broadcast %153 : vector<1x32xf32> to vector<32x32xf32>
    %155 = arith.addf %152, %154 : vector<32x32xf32>
    %cst_72 = arith.constant 0.000000e+00 : f32
    %156 = vector.broadcast %cst_72 : f32 to vector<32x32xf32>
    %157 = arith.maximumf %155, %156 : vector<32x32xf32>
    %158 = arith.addf %157, %150 : vector<32x32xf32>
    %c0_73 = arith.constant 0 : index
    %c0_74 = arith.constant 0 : index
    %159 = vector.load %arg17[%c0_73, %c0_74] : memref<32x32xf32, #tpu.memory_space<vmem>>, vector<32x32xf32>
    %cst_75 = arith.constant dense<0.000000e+00> : vector<32x32xf32>
    %160 = tpu.matmul %158, %159, %cst_75 {dimension_numbers = #tpu.dot_dimension_numbers<[1], [0], [0], [1], [0, 0, 1, 1], [], []>} : vector<32x32xf32>, vector<32x32xf32>, vector<32x32xf32> -> vector<32x32xf32>
    %c0_76 = arith.constant 0 : index
    %c0_77 = arith.constant 0 : index
    %161 = vector.load %arg18[%c0_76, %c0_77] : memref<1x32xf32, #tpu.memory_space<vmem>>, vector<1x32xf32>
    %162 = vector.broadcast %161 : vector<1x32xf32> to vector<32x32xf32>
    %163 = arith.addf %160, %162 : vector<32x32xf32>
    %cst_78 = arith.constant 0.000000e+00 : f32
    %164 = vector.broadcast %cst_78 : f32 to vector<32x32xf32>
    %165 = arith.maximumf %163, %164 : vector<32x32xf32>
    %166 = arith.addf %165, %158 : vector<32x32xf32>
    %c0_79 = arith.constant 0 : index
    %c0_80 = arith.constant 0 : index
    %167 = vector.load %arg19[%c0_79, %c0_80] : memref<32x32xf32, #tpu.memory_space<vmem>>, vector<32x32xf32>
    %cst_81 = arith.constant dense<0.000000e+00> : vector<32x32xf32>
    %168 = tpu.matmul %166, %167, %cst_81 {dimension_numbers = #tpu.dot_dimension_numbers<[1], [0], [0], [1], [0, 0, 1, 1], [], []>} : vector<32x32xf32>, vector<32x32xf32>, vector<32x32xf32> -> vector<32x32xf32>
    %c0_82 = arith.constant 0 : index
    %c0_83 = arith.constant 0 : index
    %169 = vector.load %arg20[%c0_82, %c0_83] : memref<1x32xf32, #tpu.memory_space<vmem>>, vector<1x32xf32>
    %170 = vector.broadcast %169 : vector<1x32xf32> to vector<32x32xf32>
    %171 = arith.addf %168, %170 : vector<32x32xf32>
    %cst_84 = arith.constant 0.000000e+00 : f32
    %172 = vector.broadcast %cst_84 : f32 to vector<32x32xf32>
    %173 = arith.maximumf %171, %172 : vector<32x32xf32>
    %174 = arith.addf %173, %166 : vector<32x32xf32>
    %c0_85 = arith.constant 0 : index
    %c0_86 = arith.constant 0 : index
    %175 = vector.load %arg21[%c0_85, %c0_86] : memref<32x64xf32, #tpu.memory_space<vmem>>, vector<32x64xf32>
    %cst_87 = arith.constant dense<0.000000e+00> : vector<32x64xf32>
    %176 = tpu.matmul %174, %175, %cst_87 {dimension_numbers = #tpu.dot_dimension_numbers<[1], [0], [0], [1], [0, 0, 1, 1], [], []>} : vector<32x32xf32>, vector<32x64xf32>, vector<32x64xf32> -> vector<32x64xf32>
    %c0_88 = arith.constant 0 : index
    %c0_89 = arith.constant 0 : index
    %177 = vector.load %arg22[%c0_88, %c0_89] : memref<1x64xf32, #tpu.memory_space<vmem>>, vector<1x64xf32>
    %178 = vector.broadcast %177 : vector<1x64xf32> to vector<32x64xf32>
    %179 = arith.addf %176, %178 : vector<32x64xf32>
    %180 = tpu.iota {dimensions = array<i32: 1>} : vector<32x64xi32>
    %c16_i32 = arith.constant 16 : i32
    %181 = vector.broadcast %c16_i32 : i32 to vector<32x64xi32>
    %182 = arith.cmpi sge, %180, %181 : vector<32x64xi32>
    %c32_i32 = arith.constant 32 : i32
    %183 = vector.broadcast %c32_i32 : i32 to vector<32x64xi32>
    %184 = arith.cmpi slt, %180, %183 : vector<32x64xi32>
    %185 = arith.andi %182, %184 : vector<32x64xi1>
    %cst_90 = arith.constant -5.000000e+00 : f32
    %cst_91 = arith.constant 5.000000e+00 : f32
    %186 = vector.broadcast %cst_90 : f32 to vector<32x64xf32>
    %187 = arith.maximumf %186, %179 : vector<32x64xf32>
    %188 = vector.broadcast %cst_91 : f32 to vector<32x64xf32>
    %189 = arith.minimumf %188, %187 : vector<32x64xf32>
    %190 = arith.select %185, %189, %179 : vector<32x64xi1>, vector<32x64xf32>
    %191 = vector.extract_strided_slice %190 {offsets = [0, 0], sizes = [16, 64], strides = [1, 1]} : vector<32x64xf32> to vector<16x64xf32>
    %192 = vector.extract_strided_slice %190 {offsets = [16, 0], sizes = [16, 64], strides = [1, 1]} : vector<32x64xf32> to vector<16x64xf32>
    %193 = tpu.concatenate %191, %192 in 1 : vector<16x64xf32>, vector<16x64xf32> -> vector<16x128xf32>
    %c0_92 = arith.constant 0 : index
    %c0_93 = arith.constant 0 : index
    %194 = vector.load %arg23[%c0_92, %c0_93] : memref<16x128xf32, #tpu.memory_space<vmem>>, vector<16x128xf32>
    tpu.vector_store %arg23[%c0_92, %c0_93], %193 {strides = array<i32>} : memref<16x128xf32, #tpu.memory_space<vmem>>, vector<16x128xf32>,
    return
  }
  func.func @transform_0(%arg0: i32) -> (i32, i32) {
    %c0_i32 = arith.constant 0 : i32
    %c0_i32_0 = arith.constant 0 : i32
    return %arg0, %c0_i32 : i32, i32
  }
  func.func @transform_1(%arg0: i32) -> (i32, i32) {
    %c0_i32 = arith.constant 0 : i32
    %c0_i32_0 = arith.constant 0 : i32
    %c0_i32_1 = arith.constant 0 : i32
    return %c0_i32, %c0_i32_0 : i32, i32
  }
  func.func @transform_2(%arg0: i32) -> (i32, i32) {
    %c0_i32 = arith.constant 0 : i32
    %c0_i32_0 = arith.constant 0 : i32
    %c0_i32_1 = arith.constant 0 : i32
    return %c0_i32, %c0_i32_0 : i32, i32
  }
  func.func @transform_3(%arg0: i32) -> (i32, i32) {
    %c0_i32 = arith.constant 0 : i32
    %c0_i32_0 = arith.constant 0 : i32
    %c0_i32_1 = arith.constant 0 : i32
    return %c0_i32, %c0_i32_0 : i32, i32
  }
  func.func @transform_4(%arg0: i32) -> (i32, i32) {
    %c0_i32 = arith.constant 0 : i32
    %c0_i32_0 = arith.constant 0 : i32
    %c0_i32_1 = arith.constant 0 : i32
    return %c0_i32, %c0_i32_0 : i32, i32
  }
  func.func @transform_5(%arg0: i32) -> (i32, i32) {
    %c0_i32 = arith.constant 0 : i32
    %c0_i32_0 = arith.constant 0 : i32
    %c0_i32_1 = arith.constant 0 : i32
    return %c0_i32, %c0_i32_0 : i32, i32
  }
  func.func @transform_6(%arg0: i32) -> (i32, i32) {
    %c0_i32 = arith.constant 0 : i32
    %c0_i32_0 = arith.constant 0 : i32
    %c0_i32_1 = arith.constant 0 : i32
    return %c0_i32, %c0_i32_0 : i32, i32
  }
  func.func @transform_7(%arg0: i32) -> (i32, i32) {
    %c0_i32 = arith.constant 0 : i32
    %c0_i32_0 = arith.constant 0 : i32
    %c0_i32_1 = arith.constant 0 : i32
    return %c0_i32, %c0_i32_0 : i32, i32
  }
  func.func @transform_8(%arg0: i32) -> (i32, i32) {
    %c0_i32 = arith.constant 0 : i32
    %c0_i32_0 = arith.constant 0 : i32
    %c0_i32_1 = arith.constant 0 : i32
    return %c0_i32, %c0_i32_0 : i32, i32
  }
  func.func @transform_9(%arg0: i32) -> (i32, i32) {
    %c0_i32 = arith.constant 0 : i32
    %c0_i32_0 = arith.constant 0 : i32
    %c0_i32_1 = arith.constant 0 : i32
    return %c0_i32, %c0_i32_0 : i32, i32
  }
  func.func @transform_10(%arg0: i32) -> (i32, i32) {
    %c0_i32 = arith.constant 0 : i32
    %c0_i32_0 = arith.constant 0 : i32
    %c0_i32_1 = arith.constant 0 : i32
    return %c0_i32, %c0_i32_0 : i32, i32
  }
  func.func @transform_11(%arg0: i32) -> (i32, i32) {
    %c0_i32 = arith.constant 0 : i32
    %c0_i32_0 = arith.constant 0 : i32
    %c0_i32_1 = arith.constant 0 : i32
    return %c0_i32, %c0_i32_0 : i32, i32
  }
  func.func @transform_12(%arg0: i32) -> (i32, i32) {
    %c0_i32 = arith.constant 0 : i32
    %c0_i32_0 = arith.constant 0 : i32
    %c0_i32_1 = arith.constant 0 : i32
    return %c0_i32, %c0_i32_0 : i32, i32
  }
  func.func @transform_13(%arg0: i32) -> (i32, i32) {
    %c0_i32 = arith.constant 0 : i32
    %c0_i32_0 = arith.constant 0 : i32
    %c0_i32_1 = arith.constant 0 : i32
    return %c0_i32, %c0_i32_0 : i32, i32
  }
  func.func @transform_14(%arg0: i32) -> (i32, i32) {
    %c0_i32 = arith.constant 0 : i32
    %c0_i32_0 = arith.constant 0 : i32
    %c0_i32_1 = arith.constant 0 : i32
    return %c0_i32, %c0_i32_0 : i32, i32
  }
  func.func @transform_15(%arg0: i32) -> (i32, i32) {
    %c0_i32 = arith.constant 0 : i32
    %c0_i32_0 = arith.constant 0 : i32
    %c0_i32_1 = arith.constant 0 : i32
    return %c0_i32, %c0_i32_0 : i32, i32
  }
  func.func @transform_16(%arg0: i32) -> (i32, i32) {
    %c0_i32 = arith.constant 0 : i32
    %c0_i32_0 = arith.constant 0 : i32
    %c0_i32_1 = arith.constant 0 : i32
    return %c0_i32, %c0_i32_0 : i32, i32
  }
  func.func @transform_17(%arg0: i32) -> (i32, i32) {
    %c0_i32 = arith.constant 0 : i32
    %c0_i32_0 = arith.constant 0 : i32
    %c0_i32_1 = arith.constant 0 : i32
    return %c0_i32, %c0_i32_0 : i32, i32
  }
  func.func @transform_18(%arg0: i32) -> (i32, i32) {
    %c0_i32 = arith.constant 0 : i32
    %c0_i32_0 = arith.constant 0 : i32
    %c0_i32_1 = arith.constant 0 : i32
    return %c0_i32, %c0_i32_0 : i32, i32
  }
  func.func @transform_19(%arg0: i32) -> (i32, i32) {
    %c0_i32 = arith.constant 0 : i32
    %c0_i32_0 = arith.constant 0 : i32
    %c0_i32_1 = arith.constant 0 : i32
    return %c0_i32, %c0_i32_0 : i32, i32
  }
  func.func @transform_20(%arg0: i32) -> (i32, i32) {
    %c0_i32 = arith.constant 0 : i32
    %c0_i32_0 = arith.constant 0 : i32
    %c0_i32_1 = arith.constant 0 : i32
    return %c0_i32, %c0_i32_0 : i32, i32
  }
  func.func @transform_21(%arg0: i32) -> (i32, i32) {
    %c0_i32 = arith.constant 0 : i32
    %c0_i32_0 = arith.constant 0 : i32
    %c0_i32_1 = arith.constant 0 : i32
    return %c0_i32, %c0_i32_0 : i32, i32
  }
  func.func @transform_22(%arg0: i32) -> (i32, i32) {
    %c0_i32 = arith.constant 0 : i32
    %c0_i32_0 = arith.constant 0 : i32
    return %arg0, %c0_i32 : i32, i32
  }
}

</mosaic_0001>

<llo_original>
// kernel: tpu_custom_call.1
$region0: #{tpu_custom_call.1}
  #allocation0 [shape = 'u32[]', space=smem, size = 0x4, offset = 0x4, fixed_abs, tag = 'smem constant byte address 0x4 - core index']
  #allocation1 [shape = 'u32[144,128]{1,0:T(1,128)}', space=vmem, size = 0x12000, scoped, tag = 'internal scratch']
  %s0 = inlined_call_operand.vmem [shape: f32[16,16], index: 0, kind: input, shape index: {}]
  %s1 = inlined_call_operand.vmem [shape: f32[48,32], index: 1, kind: input, shape index: {}]
  %s2 = inlined_call_operand.vmem [shape: f32[1,32], index: 2, kind: input, shape index: {}]
  %s3 = inlined_call_operand.vmem [shape: f32[96,32], index: 3, kind: input, shape index: {}]
  %s4 = inlined_call_operand.vmem [shape: f32[1,32], index: 4, kind: input, shape index: {}]
  %s5 = inlined_call_operand.vmem [shape: f32[32,32], index: 5, kind: input, shape index: {}]
  %s6 = inlined_call_operand.vmem [shape: f32[64,32], index: 6, kind: input, shape index: {}]
  %s7 = inlined_call_operand.vmem [shape: f32[1,32], index: 7, kind: input, shape index: {}]
  %s8 = inlined_call_operand.vmem [shape: f32[96,32], index: 8, kind: input, shape index: {}]
  %s9 = inlined_call_operand.vmem [shape: f32[1,32], index: 9, kind: input, shape index: {}]
  %s10 = inlined_call_operand.vmem [shape: f32[96,32], index: 10, kind: input, shape index: {}]
  %s11 = inlined_call_operand.vmem [shape: f32[1,32], index: 11, kind: input, shape index: {}]
  %s12 = inlined_call_operand.vmem [shape: f32[32,32], index: 12, kind: input, shape index: {}]
  %s13 = inlined_call_operand.vmem [shape: f32[1,32], index: 13, kind: input, shape index: {}]
  %s14 = inlined_call_operand.vmem [shape: f32[32,32], index: 14, kind: input, shape index: {}]
  %s15 = inlined_call_operand.vmem [shape: f32[1,32], index: 15, kind: input, shape index: {}]
  %s16 = inlined_call_operand.vmem [shape: f32[32,32], index: 16, kind: input, shape index: {}]
  %s17 = inlined_call_operand.vmem [shape: f32[1,32], index: 17, kind: input, shape index: {}]
  %s18 = inlined_call_operand.vmem [shape: f32[32,32], index: 18, kind: input, shape index: {}]
  %s19 = inlined_call_operand.vmem [shape: f32[1,32], index: 19, kind: input, shape index: {}]
  %s20 = inlined_call_operand.vmem [shape: f32[32,64], index: 20, kind: input, shape index: {}]
  %s21 = inlined_call_operand.vmem [shape: f32[1,64], index: 21, kind: input, shape index: {}]
  %s22 = inlined_call_operand.hbm [shape: f32[16,128], index: 22, kind: output, shape index: {}]
  %s23 = sld [smem:[#allocation0]]
  $region98: #{tpu_custom_call.1} parent=0
    _
  %s25 = ssub.s32 1, %s23
  %s26 = scalar_select 0, %s25, %s23
  $region1: #{tpu_custom_call.1} parent=0
    #allocation2 [shape = 'u8[8192]{0}', space=vmem, size = 0x2000, scoped, tag = 'output window, operand 0, single buffered']
    #allocation3 [shape = 's32[1]{0}', space=sflag, size = 0x4, scoped, tag = 'scoped memory for tpu_custom_call.1']
    %27 = vsyncpa [#allocation3], 0
    // Predicated region
    $region2: #{tpu_custom_call.1} parent=1 // pred_check
      _
    $region3: #{tpu_custom_call.1} parent=1 // pred_check_branch
      %29 = sbr.rel (0) target = $region5
    $region4: #{tpu_custom_call.1} parent=1 // pred_region
      _
    $region5: #{tpu_custom_call.1} parent=1 // pred_fallthru
      _
    // Predicated region
    $region6: #{tpu_custom_call.1} parent=1 // pred_check
      _
    $region7: #{tpu_custom_call.1} parent=1 // pred_check_branch
      %31 = sbr.rel (0) target = $region9
    $region8: #{tpu_custom_call.1} parent=1 // pred_region
      _
    $region9: #{tpu_custom_call.1} parent=1 // pred_fallthru
      _
    // Predicated region
    $region10: #{tpu_custom_call.1} parent=1 // pred_check
      _
    $region11: #{tpu_custom_call.1} parent=1 // pred_check_branch
      %33 = sbr.rel (0) target = $region13
    $region12: #{tpu_custom_call.1} parent=1 // pred_region
      _
    $region13: #{tpu_custom_call.1} parent=1 // pred_fallthru
      _
    // Predicated region
    $region14: #{tpu_custom_call.1} parent=1 // pred_check
      _
    $region15: #{tpu_custom_call.1} parent=1 // pred_check_branch
      %35 = sbr.rel (0) target = $region17
    $region16: #{tpu_custom_call.1} parent=1 // pred_region
      _
    $region17: #{tpu_custom_call.1} parent=1 // pred_fallthru
      _
    // Predicated region
    $region18: #{tpu_custom_call.1} parent=1 // pred_check
      _
    $region19: #{tpu_custom_call.1} parent=1 // pred_check_branch
      %37 = sbr.rel (0) target = $region21
    $region20: #{tpu_custom_call.1} parent=1 // pred_region
      _
    $region21: #{tpu_custom_call.1} parent=1 // pred_fallthru
      _
    // Predicated region
    $region22: #{tpu_custom_call.1} parent=1 // pred_check
      _
    $region23: #{tpu_custom_call.1} parent=1 // pred_check_branch
      %39 = sbr.rel (0) target = $region25
    $region24: #{tpu_custom_call.1} parent=1 // pred_region
      _
    $region25: #{tpu_custom_call.1} parent=1 // pred_fallthru
      _
    // Predicated region
    $region26: #{tpu_custom_call.1} parent=1 // pred_check
      _
    $region27: #{tpu_custom_call.1} parent=1 // pred_check_branch
      %41 = sbr.rel (0) target = $region29
    $region28: #{tpu_custom_call.1} parent=1 // pred_region
      _
    $region29: #{tpu_custom_call.1} parent=1 // pred_fallthru
      _
    // Predicated region
    $region30: #{tpu_custom_call.1} parent=1 // pred_check
      _
    $region31: #{tpu_custom_call.1} parent=1 // pred_check_branch
      %43 = sbr.rel (0) target = $region33
    $region32: #{tpu_custom_call.1} parent=1 // pred_region
      _
    $region33: #{tpu_custom_call.1} parent=1 // pred_fallthru
      _
    // Predicated region
    $region34: #{tpu_custom_call.1} parent=1 // pred_check
      _
    $region35: #{tpu_custom_call.1} parent=1 // pred_check_branch
      %45 = sbr.rel (0) target = $region37
    $region36: #{tpu_custom_call.1} parent=1 // pred_region
      _
    $region37: #{tpu_custom_call.1} parent=1 // pred_fallthru
      _
    // Predicated region
    $region38: #{tpu_custom_call.1} parent=1 // pred_check
      _
    $region39: #{tpu_custom_call.1} parent=1 // pred_check_branch
      %47 = sbr.rel (0) target = $region41
    $region40: #{tpu_custom_call.1} parent=1 // pred_region
      _
    $region41: #{tpu_custom_call.1} parent=1 // pred_fallthru
      _
    // Predicated region
    $region42: #{tpu_custom_call.1} parent=1 // pred_check
      _
    $region43: #{tpu_custom_call.1} parent=1 // pred_check_branch
      %49 = sbr.rel (0) target = $region45
    $region44: #{tpu_custom_call.1} parent=1 // pred_region
      _
    $region45: #{tpu_custom_call.1} parent=1 // pred_fallthru
      _
    // Predicated region
    $region46: #{tpu_custom_call.1} parent=1 // pred_check
      _
    $region47: #{tpu_custom_call.1} parent=1 // pred_check_branch
      %51 = sbr.rel (0) target = $region49
    $region48: #{tpu_custom_call.1} parent=1 // pred_region
      _
    $region49: #{tpu_custom_call.1} parent=1 // pred_fallthru
      _
    // Predicated region
    $region50: #{tpu_custom_call.1} parent=1 // pred_check
      _
    $region51: #{tpu_custom_call.1} parent=1 // pred_check_branch
      %53 = sbr.rel (0) target = $region53
    $region52: #{tpu_custom_call.1} parent=1 // pred_region
      _
    $region53: #{tpu_custom_call.1} parent=1 // pred_fallthru
      _
    // Predicated region
    $region54: #{tpu_custom_call.1} parent=1 // pred_check
      _
    $region55: #{tpu_custom_call.1} parent=1 // pred_check_branch
      %55 = sbr.rel (0) target = $region57
    $region56: #{tpu_custom_call.1} parent=1 // pred_region
      _
    $region57: #{tpu_custom_call.1} parent=1 // pred_fallthru
      _
    // Predicated region
    $region58: #{tpu_custom_call.1} parent=1 // pred_check
      _
    $region59: #{tpu_custom_call.1} parent=1 // pred_check_branch
      %57 = sbr.rel (0) target = $region61
    $region60: #{tpu_custom_call.1} parent=1 // pred_region
      _
    $region61: #{tpu_custom_call.1} parent=1 // pred_fallthru
      _
    // Predicated region
    $region62: #{tpu_custom_call.1} parent=1 // pred_check
      _
    $region63: #{tpu_custom_call.1} parent=1 // pred_check_branch
      %59 = sbr.rel (0) target = $region65
    $region64: #{tpu_custom_call.1} parent=1 // pred_region
      _
    $region65: #{tpu_custom_call.1} parent=1 // pred_fallthru
      _
    // Predicated region
    $region66: #{tpu_custom_call.1} parent=1 // pred_check
      _
    $region67: #{tpu_custom_call.1} parent=1 // pred_check_branch
      %61 = sbr.rel (0) target = $region69
    $region68: #{tpu_custom_call.1} parent=1 // pred_region
      _
    $region69: #{tpu_custom_call.1} parent=1 // pred_fallthru
      _
    // Predicated region
    $region70: #{tpu_custom_call.1} parent=1 // pred_check
      _
    $region71: #{tpu_custom_call.1} parent=1 // pred_check_branch
      %63 = sbr.rel (0) target = $region73
    $region72: #{tpu_custom_call.1} parent=1 // pred_region
      _
    $region73: #{tpu_custom_call.1} parent=1 // pred_fallthru
      _
    // Predicated region
    $region74: #{tpu_custom_call.1} parent=1 // pred_check
      _
    $region75: #{tpu_custom_call.1} parent=1 // pred_check_branch
      %65 = sbr.rel (0) target = $region77
    $region76: #{tpu_custom_call.1} parent=1 // pred_region
      _
    $region77: #{tpu_custom_call.1} parent=1 // pred_fallthru
      _
    // Predicated region
    $region78: #{tpu_custom_call.1} parent=1 // pred_check
      _
    $region79: #{tpu_custom_call.1} parent=1 // pred_check_branch
      %67 = sbr.rel (0) target = $region81
    $region80: #{tpu_custom_call.1} parent=1 // pred_region
      _
    $region81: #{tpu_custom_call.1} parent=1 // pred_fallthru
      _
    // Predicated region
    $region82: #{tpu_custom_call.1} parent=1 // pred_check
      _
    $region83: #{tpu_custom_call.1} parent=1 // pred_check_branch
      %69 = sbr.rel (0) target = $region85
    $region84: #{tpu_custom_call.1} parent=1 // pred_region
      _
    $region85: #{tpu_custom_call.1} parent=1 // pred_fallthru
      _
    // Predicated region
    $region86: #{tpu_custom_call.1} parent=1 // pred_check
      _
    $region87: #{tpu_custom_call.1} parent=1 // pred_check_branch
      %71 = sbr.rel (0) target = $region89
    $region88: #{tpu_custom_call.1} parent=1 // pred_region
      _
    $region89: #{tpu_custom_call.1} parent=1 // pred_fallthru
      _
    %v72 = vlaneseq
    %v73 = vshrl.u32 %v72, 7
    %v74 = vadd.s32 %v73, 8
    %vm75 = vcmp.lt.s32.totalorder %v73, 0
    %v76 = vsub.s32 0, %v73
    %v77 = vsel %vm75, %v76, %v73
    %v78 = vshrl.u32 %v77, 3
    %v79 = vand.u32 %v77, 7
    %v80 = vsub.s32 0, %v79
    %v81 = vsel %vm75, %v80, %v79
    %vm82 = vcmp.lt.s32.totalorder %v74, 0
    %v83 = vsub.s32 0, %v74
    %v84 = vsel %vm82, %v83, %v74
    %v85 = vshrl.u32 %v84, 3
    %v86 = vand.u32 %v84, 7
    %v87 = vsub.s32 0, %v86
    %v88 = vsel %vm82, %v87, %v86
    %vm89 = vcmp.ne.s32.totalorder %v81, 0
    %vm90 = vcmp.ne.s32.totalorder %v88, 0
    %vm91 = vcmp.lt.s32.totalorder %v81, 0
    %vm92 = vcmp.lt.s32.totalorder %v88, 0
    %vm93 = vmand %vm91, %vm89
    %vm94 = vmand %vm92, %vm90
    %v95 = vadd.s32 %v81, 8
    %v96 = vadd.s32 %v88, 8
    %v97 = vsel %vm93, %v95, %v81
    %v98 = vsel %vm94, %v96, %v88
    %vm99 = vcmp.eq.s32.totalorder %v97, 7
    %vm100 = vcmp.eq.s32.totalorder %v98, 7
    %vm101 = vcmp.eq.s32.totalorder %v97, 0
    %vm102 = vcmp.eq.s32.totalorder %v98, 0
    %v103 = vld [vmem:[%s0] sm:$0xff]
    %v104 = vld [vmem:[%s0 + $0x8] sm:$0xff]
    %v105 = vrot.slane %v103, 1
    %v106 = vrot.slane %v104, 1
    %vm107 = vcmp.lt.s32.totalorder %v73, 7
    %v108 = vsel %vm107, %v105, %v106
    %v109 = vsel %vm107, %v106, %v105
    %v110 = vsel %vm99, 1, 0
    %v111 = vsel %vm100, 1, 0
    %vm112 = vcmp.eq.s32.totalorder %v110, 1
    %vm113 = vcmp.eq.s32.totalorder %v111, 1
    %v114 = vsel %vm112, 0.0, %v108
    %v115 = vsel %vm113, 0.0, %v109
    %v116 = vrot.slane %v103, 7
    %v117 = vrot.slane %v104, 7
    %vm118 = vcmp.lt.s32.totalorder %v73, 1
    %v119 = vsel %vm118, %v116, %v117
    %v120 = vsel %vm118, %v117, %v116
    %v121 = vsel %vm101, 1, 0
    %v122 = vsel %vm102, 1, 0
    %vm123 = vcmp.eq.s32.totalorder %v121, 1
    %vm124 = vcmp.eq.s32.totalorder %v122, 1
    %v125 = vsel %vm123, 0.0, %v120
    %v126 = vsel %vm124, 0.0, %v119
    %129 = vrot.lane.b32.xlu0 %v103, 16
    %v130 = vpop.permute.xlu0 %129
    %131 = vrot.lane.b32.xlu0 %v104, 16
    %v132 = vpop.permute.xlu0 %131
    %137 = vrot.lane.b32.xlu0 %v125, 32
    %v138 = vpop.permute.xlu0 %137
    %139 = vrot.lane.b32.xlu0 %v126, 32
    %v140 = vpop.permute.xlu0 %139
    %vm143 = vcmask 130048
    %v144 = vsel %vm143, %v114, %v130
    %v145 = vsel %vm143, %v115, %v132
    %vm146 = vcmask 261120
    %v147 = vsel %vm146, %v144, %v138
    %v148 = vsel %vm146, %v145, %v140
    %v149 = vld [vmem:[%s1] sm:$0xff]
    %v150 = vld [vmem:[%s1 + $0x8] sm:$0xff]
    %v151 = vld [vmem:[%s1 + $0x10] sm:$0xff]
    %v152 = vld [vmem:[%s1 + $0x18] sm:$0xff]
    %v153 = vld [vmem:[%s1 + $0x20] sm:$0xff]
    %v154 = vld [vmem:[%s1 + $0x28] sm:$0xff]
    %v155 = vld [vmem:[%s2] sm:$0x1]
    %v157 = vlaneseq
    %v158 = vshrl.u32 %v157, 7
    %v159 = vsub.s32 0, %v158
    %v160 = vrot.slane %v155, %v159
    %vm162 = vcmask 392192
    %v164 = vsel %vm162, %v147, 0
    %v167 = vsel %vm162, %v148, 0
    %169 = vmatprep.subr.mxu0 0.0
    %170 = vmatpush1.msra.mxu0 %v149
    %171 = vmatprep.subr.mxu0 0.0
    %172 = vmatpush1.msra.mxu0 %v150
    %173 = vmatprep.subr.mxu0 0.0
    %174 = vmatpush1.msra.mxu0 %v151
    %175 = vmatprep.subr.mxu0 0.0
    %176 = vmatpush1.msra.mxu0 %v152
    %177 = vmatprep.subr.mxu0 0.0
    %178 = vmatpush1.msra.mxu0 %v153
    %179 = vmatprep.subr.mxu0 0.0
    %180 = vmatpush1.msra.mxu0 %v154
    %181 = vmatprep.subr.mxu0 0.0
    %182 = vmatpush1.msra.mxu0 0.0
    %183 = vmatprep.subr.mxu0 0.0
    %184 = vmatpush1.msra.mxu0 0.0
    %185 = vmatprep.subr.mxu0 0.0
    %186 = vmatpush1.msra.mxu0 0.0
    %187 = vmatprep.subr.mxu0 0.0
    %188 = vmatpush1.msra.mxu0 0.0
    %189 = vmatprep.subr.mxu0 0.0
    %190 = vmatpush1.msra.mxu0 0.0
    %191 = vmatprep.subr.mxu0 0.0
    %192 = vmatpush1.msra.mxu0 0.0
    %193 = vmatprep.subr.mxu0 0.0
    %194 = vmatpush1.msra.mxu0 0.0
    %195 = vmatprep.subr.mxu0 0.0
    %196 = vmatpush1.msra.mxu0 0.0
    %197 = vmatprep.subr.mxu0 0.0
    %198 = vmatpush1.msra.mxu0 0.0
    %199 = vmatprep.subr.mxu0 0.0
    %200 = vmatpush1.msra.mxu0 0.0
    %201 = vmatprep.subr.mxu0 0.0
    %202 = vmatpush1.msra.mxu0 0.0
    %203 = vmatprep.subr.mxu0 0.0
    %204 = vmatpush1.msra.mxu0 0.0
    %205 = vmatprep.subr.mxu0 0.0
    %206 = vmatpush1.msra.mxu0 0.0
    %207 = vmatprep.subr.mxu0 0.0
    %208 = vmatpush1.msra.mxu0 0.0
    %209 = vmatprep.subr.mxu0 0.0
    %210 = vmatpush1.msra.mxu0 0.0
    %211 = vmatprep.subr.mxu0 0.0
    %212 = vmatpush1.msra.mxu0 0.0
    %213 = vmatprep.subr.mxu0 0.0
    %214 = vmatpush1.msra.mxu0 0.0
    %215 = vmatprep.subr.mxu0 0.0
    %216 = vmatpush1.msra.mxu0 0.0
    %217 = vmatprep.subr.mxu0 0.0
    %218 = vmatpush1.msra.mxu0 0.0
    %219 = vmatprep.subr.mxu0 0.0
    %220 = vmatpush1.msra.mxu0 0.0
    %221 = vmatprep.subr.mxu0 0.0
    %222 = vmatpush1.msra.mxu0 0.0
    %223 = vmatprep.subr.mxu0 0.0
    %224 = vmatpush1.msra.mxu0 0.0
    %225 = vmatprep.subr.mxu0 0.0
    %226 = vmatpush1.msra.mxu0 0.0
    %227 = vmatprep.subr.mxu0 0.0
    %228 = vmatpush1.msra.mxu0 0.0
    %229 = vmatprep.subr.mxu0 0.0
    %230 = vmatpush1.msra.mxu0 0.0
    %231 = vmatprep.subr.mxu0 0.0
    %232 = vmatpush1.msra.mxu0 0.0
    %233 = vmatprep.mubr.f32.mxu0 0.0
    %234 = vmatmul.mubr.f32.gmra.mrb[0].mxu0 %v164
    %v235 = vpop.f32.mrb[0].mxu0
    %v236 = vadd.f32 %v160, %v235
    %v237 = vpop.f32.mrb[0].mxu0
    %238 = vmatprep.mubr.f32.mxu0 0.0
    %239 = vmatmul.mubr.f32.gmra.mrb[0].mxu0 %v167
    %v240 = vpop.f32.mrb[0].mxu0
    %v241 = vadd.f32 %v160, %v240
    %v242 = vpop.f32.mrb[0].mxu0
    %243 = vdwg.mxu0
    %v244 = vmax.f32 %v236, 0.0
    %v245 = vmax.f32 %v241, 0.0
    %v246 = vrot.slane %v244, 1
    %v247 = vrot.slane %v245, 1
    %v248 = vsel %vm107, %v246, %v247
    %v249 = vsel %vm107, %v247, %v246
    %v250 = vsel %vm112, 0.0, %v248
    %v251 = vsel %vm113, 0.0, %v249
    %v252 = vrot.slane %v244, 7
    %v253 = vrot.slane %v245, 7
    %v254 = vsel %vm118, %v252, %v253
    %v255 = vsel %vm118, %v253, %v252
    %v256 = vsel %vm123, 0.0, %v255
    %v257 = vsel %vm124, 0.0, %v254
    %260 = vrot.lane.b32.xlu0 %v244, 32
    %v261 = vpop.permute.xlu0 %260
    %262 = vrot.lane.b32.xlu0 %v245, 32
    %v263 = vpop.permute.xlu0 %262
    %268 = vrot.lane.b32.xlu0 %v256, 64
    %v269 = vpop.permute.xlu0 %268
    %270 = vrot.lane.b32.xlu0 %v257, 64
    %v271 = vpop.permute.xlu0 %270
    %v274 = vsel %vm146, %v250, %v261
    %v275 = vsel %vm146, %v251, %v263
    %vm276 = vcmask 523264
    %v277 = vsel %vm276, %v274, %v269
    %v278 = vsel %vm276, %v275, %v271
    %v279 = vld [vmem:[%s3] sm:$0xff]
    %v280 = vld [vmem:[%s3 + $0x8] sm:$0xff]
    %v281 = vld [vmem:[%s3 + $0x10] sm:$0xff]
    %v282 = vld [vmem:[%s3 + $0x18] sm:$0xff]
    %v283 = vld [vmem:[%s3 + $0x20] sm:$0xff]
    %v284 = vld [vmem:[%s3 + $0x28] sm:$0xff]
    %v285 = vld [vmem:[%s3 + $0x30] sm:$0xff]
    %v286 = vld [vmem:[%s3 + $0x38] sm:$0xff]
    %v287 = vld [vmem:[%s3 + $0x40] sm:$0xff]
    %v288 = vld [vmem:[%s3 + $0x48] sm:$0xff]
    %v289 = vld [vmem:[%s3 + $0x50] sm:$0xff]
    %v290 = vld [vmem:[%s3 + $0x58] sm:$0xff]
    %v291 = vld [vmem:[%s4] sm:$0x1]
    %v293 = vlaneseq
    %v294 = vshrl.u32 %v293, 7
    %v295 = vsub.s32 0, %v294
    %v296 = vrot.slane %v291, %v295
    %vm298 = vcmask 785408
    %v300 = vsel %vm298, %v277, 0
    %v303 = vsel %vm298, %v278, 0
    %305 = vmatprep.subr.mxu0 0.0
    %306 = vmatpush1.msra.mxu0 %v279
    %307 = vmatprep.subr.mxu0 0.0
    %308 = vmatpush1.msra.mxu0 %v280
    %309 = vmatprep.subr.mxu0 0.0
    %310 = vmatpush1.msra.mxu0 %v281
    %311 = vmatprep.subr.mxu0 0.0
    %312 = vmatpush1.msra.mxu0 %v282
    %313 = vmatprep.subr.mxu0 0.0
    %314 = vmatpush1.msra.mxu0 %v283
    %315 = vmatprep.subr.mxu0 0.0
    %316 = vmatpush1.msra.mxu0 %v284
    %317 = vmatprep.subr.mxu0 0.0
    %318 = vmatpush1.msra.mxu0 %v285
    %319 = vmatprep.subr.mxu0 0.0
    %320 = vmatpush1.msra.mxu0 %v286
    %321 = vmatprep.subr.mxu0 0.0
    %322 = vmatpush1.msra.mxu0 %v287
    %323 = vmatprep.subr.mxu0 0.0
    %324 = vmatpush1.msra.mxu0 %v288
    %325 = vmatprep.subr.mxu0 0.0
    %326 = vmatpush1.msra.mxu0 %v289
    %327 = vmatprep.subr.mxu0 0.0
    %328 = vmatpush1.msra.mxu0 %v290
    %329 = vmatprep.subr.mxu0 0.0
    %330 = vmatpush1.msra.mxu0 0.0
    %331 = vmatprep.subr.mxu0 0.0
    %332 = vmatpush1.msra.mxu0 0.0
    %333 = vmatprep.subr.mxu0 0.0
    %334 = vmatpush1.msra.mxu0 0.0
    %335 = vmatprep.subr.mxu0 0.0
    %336 = vmatpush1.msra.mxu0 0.0
    %337 = vmatprep.subr.mxu0 0.0
    %338 = vmatpush1.msra.mxu0 0.0
    %339 = vmatprep.subr.mxu0 0.0
    %340 = vmatpush1.msra.mxu0 0.0
    %341 = vmatprep.subr.mxu0 0.0
    %342 = vmatpush1.msra.mxu0 0.0
    %343 = vmatprep.subr.mxu0 0.0
    %344 = vmatpush1.msra.mxu0 0.0
    %345 = vmatprep.subr.mxu0 0.0
    %346 = vmatpush1.msra.mxu0 0.0
    %347 = vmatprep.subr.mxu0 0.0
    %348 = vmatpush1.msra.mxu0 0.0
    %349 = vmatprep.subr.mxu0 0.0
    %350 = vmatpush1.msra.mxu0 0.0
    %351 = vmatprep.subr.mxu0 0.0
    %352 = vmatpush1.msra.mxu0 0.0
    %353 = vmatprep.subr.mxu0 0.0
    %354 = vmatpush1.msra.mxu0 0.0
    %355 = vmatprep.subr.mxu0 0.0
    %356 = vmatpush1.msra.mxu0 0.0
    %357 = vmatprep.subr.mxu0 0.0
    %358 = vmatpush1.msra.mxu0 0.0
    %359 = vmatprep.subr.mxu0 0.0
    %360 = vmatpush1.msra.mxu0 0.0
    %361 = vmatprep.subr.mxu0 0.0
    %362 = vmatpush1.msra.mxu0 0.0
    %363 = vmatprep.subr.mxu0 0.0
    %364 = vmatpush1.msra.mxu0 0.0
    %365 = vmatprep.subr.mxu0 0.0
    %366 = vmatpush1.msra.mxu0 0.0
    %367 = vmatprep.subr.mxu0 0.0
    %368 = vmatpush1.msra.mxu0 0.0
    %369 = vmatprep.mubr.f32.mxu0 0.0
    %370 = vmatmul.mubr.f32.gmra.mrb[0].mxu0 %v300
    %v371 = vpop.f32.mrb[0].mxu0
    %v372 = vadd.f32 %v296, %v371
    %v373 = vpop.f32.mrb[0].mxu0
    %374 = vmatprep.mubr.f32.mxu0 0.0
    %375 = vmatmul.mubr.f32.gmra.mrb[0].mxu0 %v303
    %v376 = vpop.f32.mrb[0].mxu0
    %v377 = vadd.f32 %v296, %v376
    %v378 = vpop.f32.mrb[0].mxu0
    %379 = vdwg.mxu0
    %v380 = vmax.f32 %v372, 0.0
    %v381 = vmax.f32 %v377, 0.0
    %v382 = vadd.f32 %v380, %v244
    %v383 = vadd.f32 %v381, %v245
    %v384 = vld [vmem:[%s7] sm:$0x1]
    %v385 = vld [vmem:[%s5] sm:$0xff]
    %v386 = vld [vmem:[%s5 + $0x8] sm:$0xff]
    %v387 = vld [vmem:[%s5 + $0x10] sm:$0xff]
    %v388 = vld [vmem:[%s5 + $0x18] sm:$0xff]
    %v390 = vlaneseq
    %v391 = vshrl.u32 %v390, 7
    %v392 = vsub.s32 0, %v391
    %v393 = vrot.slane %v384, %v392
    %v396 = vsel %vm146, %v382, 0
    %v399 = vsel %vm146, %v383, 0
    %401 = vmatprep.subr.mxu0 0.0
    %402 = vmatpush1.msra.mxu0 %v385
    %403 = vmatprep.subr.mxu0 0.0
    %404 = vmatpush1.msra.mxu0 %v386
    %405 = vmatprep.subr.mxu0 0.0
    %406 = vmatpush1.msra.mxu0 %v387
    %407 = vmatprep.subr.mxu0 0.0
    %408 = vmatpush1.msra.mxu0 %v388
    %409 = vmatprep.subr.mxu0 0.0
    %410 = vmatpush1.msra.mxu0 0.0
    %411 = vmatprep.subr.mxu0 0.0
    %412 = vmatpush1.msra.mxu0 0.0
    %413 = vmatprep.subr.mxu0 0.0
    %414 = vmatpush1.msra.mxu0 0.0
    %415 = vmatprep.subr.mxu0 0.0
    %416 = vmatpush1.msra.mxu0 0.0
    %417 = vmatprep.subr.mxu0 0.0
    %418 = vmatpush1.msra.mxu0 0.0
    %419 = vmatprep.subr.mxu0 0.0
    %420 = vmatpush1.msra.mxu0 0.0
    %421 = vmatprep.subr.mxu0 0.0
    %422 = vmatpush1.msra.mxu0 0.0
    %423 = vmatprep.subr.mxu0 0.0
    %424 = vmatpush1.msra.mxu0 0.0
    %425 = vmatprep.subr.mxu0 0.0
    %426 = vmatpush1.msra.mxu0 0.0
    %427 = vmatprep.subr.mxu0 0.0
    %428 = vmatpush1.msra.mxu0 0.0
    %429 = vmatprep.subr.mxu0 0.0
    %430 = vmatpush1.msra.mxu0 0.0
    %431 = vmatprep.subr.mxu0 0.0
    %432 = vmatpush1.msra.mxu0 0.0
    %433 = vmatprep.subr.mxu0 0.0
    %434 = vmatpush1.msra.mxu0 0.0
    %435 = vmatprep.subr.mxu0 0.0
    %436 = vmatpush1.msra.mxu0 0.0
    %437 = vmatprep.subr.mxu0 0.0
    %438 = vmatpush1.msra.mxu0 0.0
    %439 = vmatprep.subr.mxu0 0.0
    %440 = vmatpush1.msra.mxu0 0.0
    %441 = vmatprep.subr.mxu0 0.0
    %442 = vmatpush1.msra.mxu0 0.0
    %443 = vmatprep.subr.mxu0 0.0
    %444 = vmatpush1.msra.mxu0 0.0
    %445 = vmatprep.subr.mxu0 0.0
    %446 = vmatpush1.msra.mxu0 0.0
    %447 = vmatprep.subr.mxu0 0.0
    %448 = vmatpush1.msra.mxu0 0.0
    %449 = vmatprep.subr.mxu0 0.0
    %450 = vmatpush1.msra.mxu0 0.0
    %451 = vmatprep.subr.mxu0 0.0
    %452 = vmatpush1.msra.mxu0 0.0
    %453 = vmatprep.subr.mxu0 0.0
    %454 = vmatpush1.msra.mxu0 0.0
    %455 = vmatprep.subr.mxu0 0.0
    %456 = vmatpush1.msra.mxu0 0.0
    %457 = vmatprep.subr.mxu0 0.0
    %458 = vmatpush1.msra.mxu0 0.0
    %459 = vmatprep.subr.mxu0 0.0
    %460 = vmatpush1.msra.mxu0 0.0
    %461 = vmatprep.subr.mxu0 0.0
    %462 = vmatpush1.msra.mxu0 0.0
    %463 = vmatprep.subr.mxu0 0.0
    %464 = vmatpush1.msra.mxu0 0.0
    %465 = vmatprep.mubr.f32.mxu0 0.0
    %466 = vmatmul.mubr.f32.gmra.mrb[0].mxu0 %v396
    %v467 = vpop.f32.mrb[0].mxu0
    %v468 = vadd.f32 %v393, %v467
    %v469 = vpop.f32.mrb[0].mxu0
    %470 = vmatprep.mubr.f32.mxu0 0.0
    %471 = vmatmul.mubr.f32.gmra.mrb[0].mxu0 %v399
    %v472 = vpop.f32.mrb[0].mxu0
    %v473 = vadd.f32 %v393, %v472
    %v474 = vpop.f32.mrb[0].mxu0
    %475 = vdwg.mxu0
    %v476 = vmax.f32 %v468, 0.0
    %v477 = vmax.f32 %v473, 0.0
    %v478 = vrot.slane %v382, 1
    %v479 = vrot.slane %v383, 1
    %v480 = vsel %vm107, %v478, %v479
    %v481 = vsel %vm107, %v479, %v478
    %v482 = vsel %vm112, 0.0, %v480
    %v483 = vsel %vm113, 0.0, %v481
    %484 = vrot.lane.b32.xlu0 %v382, 32
    %v485 = vpop.permute.xlu0 %484
    %486 = vrot.lane.b32.xlu0 %v383, 32
    %v487 = vpop.permute.xlu0 %486
    %v490 = vsel %vm146, %v482, %v485
    %v491 = vsel %vm146, %v483, %v487
    %v492 = vld [vmem:[%s6] sm:$0xff]
    %v493 = vld [vmem:[%s6 + $0x8] sm:$0xff]
    %v494 = vld [vmem:[%s6 + $0x10] sm:$0xff]
    %v495 = vld [vmem:[%s6 + $0x18] sm:$0xff]
    %v496 = vld [vmem:[%s6 + $0x20] sm:$0xff]
    %v497 = vld [vmem:[%s6 + $0x28] sm:$0xff]
    %v498 = vld [vmem:[%s6 + $0x30] sm:$0xff]
    %v499 = vld [vmem:[%s6 + $0x38] sm:$0xff]
    %v501 = vsel %vm276, %v490, 0
    %v504 = vsel %vm276, %v491, 0
    %506 = vmatprep.subr.mxu0 0.0
    %507 = vmatpush1.msra.mxu0 %v492
    %508 = vmatprep.subr.mxu0 0.0
    %509 = vmatpush1.msra.mxu0 %v493
    %510 = vmatprep.subr.mxu0 0.0
    %511 = vmatpush1.msra.mxu0 %v494
    %512 = vmatprep.subr.mxu0 0.0
    %513 = vmatpush1.msra.mxu0 %v495
    %514 = vmatprep.subr.mxu0 0.0
    %515 = vmatpush1.msra.mxu0 %v496
    %516 = vmatprep.subr.mxu0 0.0
    %517 = vmatpush1.msra.mxu0 %v497
    %518 = vmatprep.subr.mxu0 0.0
    %519 = vmatpush1.msra.mxu0 %v498
    %520 = vmatprep.subr.mxu0 0.0
    %521 = vmatpush1.msra.mxu0 %v499
    %522 = vmatprep.subr.mxu0 0.0
    %523 = vmatpush1.msra.mxu0 0.0
    %524 = vmatprep.subr.mxu0 0.0
    %525 = vmatpush1.msra.mxu0 0.0
    %526 = vmatprep.subr.mxu0 0.0
    %527 = vmatpush1.msra.mxu0 0.0
    %528 = vmatprep.subr.mxu0 0.0
    %529 = vmatpush1.msra.mxu0 0.0
    %530 = vmatprep.subr.mxu0 0.0
    %531 = vmatpush1.msra.mxu0 0.0
    %532 = vmatprep.subr.mxu0 0.0
    %533 = vmatpush1.msra.mxu0 0.0
    %534 = vmatprep.subr.mxu0 0.0
    %535 = vmatpush1.msra.mxu0 0.0
    %536 = vmatprep.subr.mxu0 0.0
    %537 = vmatpush1.msra.mxu0 0.0
    %538 = vmatprep.subr.mxu0 0.0
    %539 = vmatpush1.msra.mxu0 0.0
    %540 = vmatprep.subr.mxu0 0.0
    %541 = vmatpush1.msra.mxu0 0.0
    %542 = vmatprep.subr.mxu0 0.0
    %543 = vmatpush1.msra.mxu0 0.0
    %544 = vmatprep.subr.mxu0 0.0
    %545 = vmatpush1.msra.mxu0 0.0
    %546 = vmatprep.subr.mxu0 0.0
    %547 = vmatpush1.msra.mxu0 0.0
    %548 = vmatprep.subr.mxu0 0.0
    %549 = vmatpush1.msra.mxu0 0.0
    %550 = vmatprep.subr.mxu0 0.0
    %551 = vmatpush1.msra.mxu0 0.0
    %552 = vmatprep.subr.mxu0 0.0
    %553 = vmatpush1.msra.mxu0 0.0
    %554 = vmatprep.subr.mxu0 0.0
    %555 = vmatpush1.msra.mxu0 0.0
    %556 = vmatprep.subr.mxu0 0.0
    %557 = vmatpush1.msra.mxu0 0.0
    %558 = vmatprep.subr.mxu0 0.0
    %559 = vmatpush1.msra.mxu0 0.0
    %560 = vmatprep.subr.mxu0 0.0
    %561 = vmatpush1.msra.mxu0 0.0
    %562 = vmatprep.subr.mxu0 0.0
    %563 = vmatpush1.msra.mxu0 0.0
    %564 = vmatprep.subr.mxu0 0.0
    %565 = vmatpush1.msra.mxu0 0.0
    %566 = vmatprep.subr.mxu0 0.0
    %567 = vmatpush1.msra.mxu0 0.0
    %568 = vmatprep.subr.mxu0 0.0
    %569 = vmatpush1.msra.mxu0 0.0
    %570 = vmatprep.mubr.f32.mxu0 0.0
    %571 = vmatmul.mubr.f32.gmra.mrb[0].mxu0 %v501
    %v572 = vpop.f32.mrb[0].mxu0
    %v573 = vadd.f32 %v393, %v572
    %v574 = vpop.f32.mrb[0].mxu0
    %575 = vmatprep.mubr.f32.mxu0 0.0
    %576 = vmatmul.mubr.f32.gmra.mrb[0].mxu0 %v504
    %v577 = vpop.f32.mrb[0].mxu0
    %v578 = vadd.f32 %v393, %v577
    %v579 = vpop.f32.mrb[0].mxu0
    %580 = vdwg.mxu0
    %v581 = vmax.f32 %v573, 0.0
    %v582 = vmax.f32 %v578, 0.0
    %v583 = vrot.slane %v581, 7
    %v584 = vrot.slane %v582, 7
    %v585 = vsel %vm118, %v583, %v584
    %v586 = vsel %vm118, %v584, %v583
    %v587 = vsel %vm123, 0.0, %v586
    %v588 = vsel %vm124, 0.0, %v585
    %591 = vrot.lane.b32.xlu0 %v476, 32
    %v592 = vpop.permute.xlu0 %591
    %593 = vrot.lane.b32.xlu0 %v477, 32
    %v594 = vpop.permute.xlu0 %593
    %599 = vrot.lane.b32.xlu0 %v587, 64
    %v600 = vpop.permute.xlu0 %599
    %601 = vrot.lane.b32.xlu0 %v588, 64
    %v602 = vpop.permute.xlu0 %601
    %v605 = vsel %vm146, %v581, %v592
    %v606 = vsel %vm146, %v582, %v594
    %v607 = vsel %vm276, %v605, %v600
    %v608 = vsel %vm276, %v606, %v602
    %v609 = vrot.slane %v476, 1
    %v610 = vrot.slane %v477, 1
    %v611 = vsel %vm107, %v609, %v610
    %v612 = vsel %vm107, %v610, %v609
    %v613 = vsel %vm112, 0.0, %v611
    %v614 = vsel %vm113, 0.0, %v612
    %617 = vrot.lane.b32.xlu0 %v581, 32
    %v618 = vpop.permute.xlu0 %617
    %619 = vrot.lane.b32.xlu0 %v582, 32
    %v620 = vpop.permute.xlu0 %619
    %623 = vrot.lane.b32.xlu0 %v476, 64
    %v624 = vpop.permute.xlu0 %623
    %625 = vrot.lane.b32.xlu0 %v477, 64
    %v626 = vpop.permute.xlu0 %625
    %v629 = vsel %vm146, %v613, %v618
    %v630 = vsel %vm146, %v614, %v620
    %v631 = vsel %vm276, %v629, %v624
    %v632 = vsel %vm276, %v630, %v626
    %v633 = vld [vmem:[%s8] sm:$0xff]
    %v634 = vld [vmem:[%s8 + $0x8] sm:$0xff]
    %v635 = vld [vmem:[%s8 + $0x10] sm:$0xff]
    %v636 = vld [vmem:[%s8 + $0x18] sm:$0xff]
    %v637 = vld [vmem:[%s8 + $0x20] sm:$0xff]
    %v638 = vld [vmem:[%s8 + $0x28] sm:$0xff]
    %v639 = vld [vmem:[%s8 + $0x30] sm:$0xff]
    %v640 = vld [vmem:[%s8 + $0x38] sm:$0xff]
    %v641 = vld [vmem:[%s8 + $0x40] sm:$0xff]
    %v642 = vld [vmem:[%s8 + $0x48] sm:$0xff]
    %v643 = vld [vmem:[%s8 + $0x50] sm:$0xff]
    %v644 = vld [vmem:[%s8 + $0x58] sm:$0xff]
    %v645 = vld [vmem:[%s9] sm:$0x1]
    %v647 = vlaneseq
    %v648 = vshrl.u32 %v647, 7
    %v649 = vsub.s32 0, %v648
    %v650 = vrot.slane %v645, %v649
    %v653 = vsel %vm298, %v607, 0
    %v656 = vsel %vm298, %v608, 0
    %v659 = vsel %vm298, %v631, 0
    %v662 = vsel %vm298, %v632, 0
    %664 = vmatprep.subr.mxu0 0.0
    %665 = vmatpush1.msra.mxu0 %v633
    %666 = vmatprep.subr.mxu0 0.0
    %667 = vmatpush1.msra.mxu0 %v634
    %668 = vmatprep.subr.mxu0 0.0
    %669 = vmatpush1.msra.mxu0 %v635
    %670 = vmatprep.subr.mxu0 0.0
    %671 = vmatpush1.msra.mxu0 %v636
    %672 = vmatprep.subr.mxu0 0.0
    %673 = vmatpush1.msra.mxu0 %v637
    %674 = vmatprep.subr.mxu0 0.0
    %675 = vmatpush1.msra.mxu0 %v638
    %676 = vmatprep.subr.mxu0 0.0
    %677 = vmatpush1.msra.mxu0 %v639
    %678 = vmatprep.subr.mxu0 0.0
    %679 = vmatpush1.msra.mxu0 %v640
    %680 = vmatprep.subr.mxu0 0.0
    %681 = vmatpush1.msra.mxu0 %v641
    %682 = vmatprep.subr.mxu0 0.0
    %683 = vmatpush1.msra.mxu0 %v642
    %684 = vmatprep.subr.mxu0 0.0
    %685 = vmatpush1.msra.mxu0 %v643
    %686 = vmatprep.subr.mxu0 0.0
    %687 = vmatpush1.msra.mxu0 %v644
    %688 = vmatprep.subr.mxu0 0.0
    %689 = vmatpush1.msra.mxu0 0.0
    %690 = vmatprep.subr.mxu0 0.0
    %691 = vmatpush1.msra.mxu0 0.0
    %692 = vmatprep.subr.mxu0 0.0
    %693 = vmatpush1.msra.mxu0 0.0
    %694 = vmatprep.subr.mxu0 0.0
    %695 = vmatpush1.msra.mxu0 0.0
    %696 = vmatprep.subr.mxu0 0.0
    %697 = vmatpush1.msra.mxu0 0.0
    %698 = vmatprep.subr.mxu0 0.0
    %699 = vmatpush1.msra.mxu0 0.0
    %700 = vmatprep.subr.mxu0 0.0
    %701 = vmatpush1.msra.mxu0 0.0
    %702 = vmatprep.subr.mxu0 0.0
    %703 = vmatpush1.msra.mxu0 0.0
    %704 = vmatprep.subr.mxu0 0.0
    %705 = vmatpush1.msra.mxu0 0.0
    %706 = vmatprep.subr.mxu0 0.0
    %707 = vmatpush1.msra.mxu0 0.0
    %708 = vmatprep.subr.mxu0 0.0
    %709 = vmatpush1.msra.mxu0 0.0
    %710 = vmatprep.subr.mxu0 0.0
    %711 = vmatpush1.msra.mxu0 0.0
    %712 = vmatprep.subr.mxu0 0.0
    %713 = vmatpush1.msra.mxu0 0.0
    %714 = vmatprep.subr.mxu0 0.0
    %715 = vmatpush1.msra.mxu0 0.0
    %716 = vmatprep.subr.mxu0 0.0
    %717 = vmatpush1.msra.mxu0 0.0
    %718 = vmatprep.subr.mxu0 0.0
    %719 = vmatpush1.msra.mxu0 0.0
    %720 = vmatprep.subr.mxu0 0.0
    %721 = vmatpush1.msra.mxu0 0.0
    %722 = vmatprep.subr.mxu0 0.0
    %723 = vmatpush1.msra.mxu0 0.0
    %724 = vmatprep.subr.mxu0 0.0
    %725 = vmatpush1.msra.mxu0 0.0
    %726 = vmatprep.subr.mxu0 0.0
    %727 = vmatpush1.msra.mxu0 0.0
    %728 = vmatprep.mubr.f32.mxu0 0.0
    %729 = vmatmul.mubr.f32.gmra.mrb[0].mxu0 %v653
    %v730 = vpop.f32.mrb[0].mxu0
    %v731 = vadd.f32 %v650, %v730
    %v732 = vpop.f32.mrb[0].mxu0
    %733 = vmatprep.mubr.f32.mxu0 0.0
    %734 = vmatmul.mubr.f32.gmra.mrb[0].mxu0 %v656
    %v735 = vpop.f32.mrb[0].mxu0
    %v736 = vadd.f32 %v650, %v735
    %v737 = vpop.f32.mrb[0].mxu0
    %738 = vmatprep.mubr.f32.mxu0 0.0
    %739 = vmatmul.mubr.f32.gmra.mrb[0].mxu0 %v659
    %v740 = vpop.f32.mrb[0].mxu0
    %v741 = vadd.f32 %v650, %v740
    %v742 = vpop.f32.mrb[0].mxu0
    %743 = vmatprep.mubr.f32.mxu0 0.0
    %744 = vmatmul.mubr.f32.gmra.mrb[0].mxu0 %v662
    %v745 = vpop.f32.mrb[0].mxu0
    %v746 = vadd.f32 %v650, %v745
    %v747 = vpop.f32.mrb[0].mxu0
    %748 = vdwg.mxu0
    %v749 = vmax.f32 %v731, 0.0
    %v750 = vmax.f32 %v736, 0.0
    %v751 = vmax.f32 %v741, 0.0
    %v752 = vmax.f32 %v746, 0.0
    %v753 = vadd.f32 %v749, %v476
    %v754 = vadd.f32 %v750, %v477
    %v755 = vadd.f32 %v751, %v581
    %v756 = vadd.f32 %v752, %v582
    %v757 = vrot.slane %v755, 7
    %v758 = vrot.slane %v756, 7
    %v759 = vsel %vm118, %v757, %v758
    %v760 = vsel %vm118, %v758, %v757
    %v761 = vsel %vm123, 0.0, %v760
    %v762 = vsel %vm124, 0.0, %v759
    %765 = vrot.lane.b32.xlu0 %v753, 32
    %v766 = vpop.permute.xlu0 %765
    %767 = vrot.lane.b32.xlu0 %v754, 32
    %v768 = vpop.permute.xlu0 %767
    %773 = vrot.lane.b32.xlu0 %v761, 64
    %v774 = vpop.permute.xlu0 %773
    %775 = vrot.lane.b32.xlu0 %v762, 64
    %v776 = vpop.permute.xlu0 %775
    %v779 = vsel %vm146, %v755, %v766
    %v780 = vsel %vm146, %v756, %v768
    %v781 = vsel %vm276, %v779, %v774
    %v782 = vsel %vm276, %v780, %v776
    %v783 = vrot.slane %v753, 1
    %v784 = vrot.slane %v754, 1
    %v785 = vsel %vm107, %v783, %v784
    %v786 = vsel %vm107, %v784, %v783
    %v787 = vsel %vm112, 0.0, %v785
    %v788 = vsel %vm113, 0.0, %v786
    %791 = vrot.lane.b32.xlu0 %v755, 32
    %v792 = vpop.permute.xlu0 %791
    %793 = vrot.lane.b32.xlu0 %v756, 32
    %v794 = vpop.permute.xlu0 %793
    %797 = vrot.lane.b32.xlu0 %v753, 64
    %v798 = vpop.permute.xlu0 %797
    %799 = vrot.lane.b32.xlu0 %v754, 64
    %v800 = vpop.permute.xlu0 %799
    %v803 = vsel %vm146, %v787, %v792
    %v804 = vsel %vm146, %v788, %v794
    %v805 = vsel %vm276, %v803, %v798
    %v806 = vsel %vm276, %v804, %v800
    %v807 = vld [vmem:[%s10] sm:$0xff]
    %v808 = vld [vmem:[%s10 + $0x8] sm:$0xff]
    %v809 = vld [vmem:[%s10 + $0x10] sm:$0xff]
    %v810 = vld [vmem:[%s10 + $0x18] sm:$0xff]
    %v811 = vld [vmem:[%s10 + $0x20] sm:$0xff]
    %v812 = vld [vmem:[%s10 + $0x28] sm:$0xff]
    %v813 = vld [vmem:[%s10 + $0x30] sm:$0xff]
    %v814 = vld [vmem:[%s10 + $0x38] sm:$0xff]
    %v815 = vld [vmem:[%s10 + $0x40] sm:$0xff]
    %v816 = vld [vmem:[%s10 + $0x48] sm:$0xff]
    %v817 = vld [vmem:[%s10 + $0x50] sm:$0xff]
    %v818 = vld [vmem:[%s10 + $0x58] sm:$0xff]
    %v819 = vld [vmem:[%s11] sm:$0x1]
    %v821 = vlaneseq
    %v822 = vshrl.u32 %v821, 7
    %v823 = vsub.s32 0, %v822
    %v824 = vrot.slane %v819, %v823
    %v827 = vsel %vm298, %v781, 0
    %v830 = vsel %vm298, %v782, 0
    %v833 = vsel %vm298, %v805, 0
    %v836 = vsel %vm298, %v806, 0
    %838 = vmatprep.subr.mxu0 0.0
    %839 = vmatpush1.msra.mxu0 %v807
    %840 = vmatprep.subr.mxu0 0.0
    %841 = vmatpush1.msra.mxu0 %v808
    %842 = vmatprep.subr.mxu0 0.0
    %843 = vmatpush1.msra.mxu0 %v809
    %844 = vmatprep.subr.mxu0 0.0
    %845 = vmatpush1.msra.mxu0 %v810
    %846 = vmatprep.subr.mxu0 0.0
    %847 = vmatpush1.msra.mxu0 %v811
    %848 = vmatprep.subr.mxu0 0.0
    %849 = vmatpush1.msra.mxu0 %v812
    %850 = vmatprep.subr.mxu0 0.0
    %851 = vmatpush1.msra.mxu0 %v813
    %852 = vmatprep.subr.mxu0 0.0
    %853 = vmatpush1.msra.mxu0 %v814
    %854 = vmatprep.subr.mxu0 0.0
    %855 = vmatpush1.msra.mxu0 %v815
    %856 = vmatprep.subr.mxu0 0.0
    %857 = vmatpush1.msra.mxu0 %v816
    %858 = vmatprep.subr.mxu0 0.0
    %859 = vmatpush1.msra.mxu0 %v817
    %860 = vmatprep.subr.mxu0 0.0
    %861 = vmatpush1.msra.mxu0 %v818
    %862 = vmatprep.subr.mxu0 0.0
    %863 = vmatpush1.msra.mxu0 0.0
    %864 = vmatprep.subr.mxu0 0.0
    %865 = vmatpush1.msra.mxu0 0.0
    %866 = vmatprep.subr.mxu0 0.0
    %867 = vmatpush1.msra.mxu0 0.0
    %868 = vmatprep.subr.mxu0 0.0
    %869 = vmatpush1.msra.mxu0 0.0
    %870 = vmatprep.subr.mxu0 0.0
    %871 = vmatpush1.msra.mxu0 0.0
    %872 = vmatprep.subr.mxu0 0.0
    %873 = vmatpush1.msra.mxu0 0.0
    %874 = vmatprep.subr.mxu0 0.0
    %875 = vmatpush1.msra.mxu0 0.0
    %876 = vmatprep.subr.mxu0 0.0
    %877 = vmatpush1.msra.mxu0 0.0
    %878 = vmatprep.subr.mxu0 0.0
    %879 = vmatpush1.msra.mxu0 0.0
    %880 = vmatprep.subr.mxu0 0.0
    %881 = vmatpush1.msra.mxu0 0.0
    %882 = vmatprep.subr.mxu0 0.0
    %883 = vmatpush1.msra.mxu0 0.0
    %884 = vmatprep.subr.mxu0 0.0
    %885 = vmatpush1.msra.mxu0 0.0
    %886 = vmatprep.subr.mxu0 0.0
    %887 = vmatpush1.msra.mxu0 0.0
    %888 = vmatprep.subr.mxu0 0.0
    %889 = vmatpush1.msra.mxu0 0.0
    %890 = vmatprep.subr.mxu0 0.0
    %891 = vmatpush1.msra.mxu0 0.0
    %892 = vmatprep.subr.mxu0 0.0
    %893 = vmatpush1.msra.mxu0 0.0
    %894 = vmatprep.subr.mxu0 0.0
    %895 = vmatpush1.msra.mxu0 0.0
    %896 = vmatprep.subr.mxu0 0.0
    %897 = vmatpush1.msra.mxu0 0.0
    %898 = vmatprep.subr.mxu0 0.0
    %899 = vmatpush1.msra.mxu0 0.0
    %900 = vmatprep.subr.mxu0 0.0
    %901 = vmatpush1.msra.mxu0 0.0
    %902 = vmatprep.mubr.f32.mxu0 0.0
    %903 = vmatmul.mubr.f32.gmra.mrb[0].mxu0 %v827
    %v904 = vpop.f32.mrb[0].mxu0
    %v905 = vadd.f32 %v824, %v904
    %v906 = vpop.f32.mrb[0].mxu0
    %907 = vmatprep.mubr.f32.mxu0 0.0
    %908 = vmatmul.mubr.f32.gmra.mrb[0].mxu0 %v830
    %v909 = vpop.f32.mrb[0].mxu0
    %v910 = vadd.f32 %v824, %v909
    %v911 = vpop.f32.mrb[0].mxu0
    %912 = vmatprep.mubr.f32.mxu0 0.0
    %913 = vmatmul.mubr.f32.gmra.mrb[0].mxu0 %v833
    %v914 = vpop.f32.mrb[0].mxu0
    %v915 = vadd.f32 %v824, %v914
    %v916 = vpop.f32.mrb[0].mxu0
    %917 = vmatprep.mubr.f32.mxu0 0.0
    %918 = vmatmul.mubr.f32.gmra.mrb[0].mxu0 %v836
    %v919 = vpop.f32.mrb[0].mxu0
    %v920 = vadd.f32 %v824, %v919
    %v921 = vpop.f32.mrb[0].mxu0
    %922 = vdwg.mxu0
    %v923 = vmax.f32 %v905, 0.0
    %v924 = vmax.f32 %v910, 0.0
    %v925 = vmax.f32 %v915, 0.0
    %v926 = vmax.f32 %v920, 0.0
    %v927 = vadd.f32 %v923, %v753
    %v928 = vadd.f32 %v924, %v754
    %v929 = vadd.f32 %v925, %v755
    %v930 = vadd.f32 %v926, %v756
    %v931 = vld [vmem:[%s12] sm:$0xff]
    %v932 = vld [vmem:[%s12 + $0x8] sm:$0xff]
    %v933 = vld [vmem:[%s12 + $0x10] sm:$0xff]
    %v934 = vld [vmem:[%s12 + $0x18] sm:$0xff]
    %v935 = vld [vmem:[%s13] sm:$0x1]
    %v937 = vlaneseq
    %v938 = vshrl.u32 %v937, 7
    %v939 = vsub.s32 0, %v938
    %v940 = vrot.slane %v935, %v939
    %v943 = vsel %vm146, %v927, 0
    %v946 = vsel %vm146, %v928, 0
    %v949 = vsel %vm146, %v929, 0
    %v952 = vsel %vm146, %v930, 0
    %954 = vmatprep.subr.mxu0 0.0
    %955 = vmatpush1.msra.mxu0 %v931
    %956 = vmatprep.subr.mxu0 0.0
    %957 = vmatpush1.msra.mxu0 %v932
    %958 = vmatprep.subr.mxu0 0.0
    %959 = vmatpush1.msra.mxu0 %v933
    %960 = vmatprep.subr.mxu0 0.0
    %961 = vmatpush1.msra.mxu0 %v934
    %962 = vmatprep.subr.mxu0 0.0
    %963 = vmatpush1.msra.mxu0 0.0
    %964 = vmatprep.subr.mxu0 0.0
    %965 = vmatpush1.msra.mxu0 0.0
    %966 = vmatprep.subr.mxu0 0.0
    %967 = vmatpush1.msra.mxu0 0.0
    %968 = vmatprep.subr.mxu0 0.0
    %969 = vmatpush1.msra.mxu0 0.0
    %970 = vmatprep.subr.mxu0 0.0
    %971 = vmatpush1.msra.mxu0 0.0
    %972 = vmatprep.subr.mxu0 0.0
    %973 = vmatpush1.msra.mxu0 0.0
    %974 = vmatprep.subr.mxu0 0.0
    %975 = vmatpush1.msra.mxu0 0.0
    %976 = vmatprep.subr.mxu0 0.0
    %977 = vmatpush1.msra.mxu0 0.0
    %978 = vmatprep.subr.mxu0 0.0
    %979 = vmatpush1.msra.mxu0 0.0
    %980 = vmatprep.subr.mxu0 0.0
    %981 = vmatpush1.msra.mxu0 0.0
    %982 = vmatprep.subr.mxu0 0.0
    %983 = vmatpush1.msra.mxu0 0.0
    %984 = vmatprep.subr.mxu0 0.0
    %985 = vmatpush1.msra.mxu0 0.0
    %986 = vmatprep.subr.mxu0 0.0
    %987 = vmatpush1.msra.mxu0 0.0
    %988 = vmatprep.subr.mxu0 0.0
    %989 = vmatpush1.msra.mxu0 0.0
    %990 = vmatprep.subr.mxu0 0.0
    %991 = vmatpush1.msra.mxu0 0.0
    %992 = vmatprep.subr.mxu0 0.0
    %993 = vmatpush1.msra.mxu0 0.0
    %994 = vmatprep.subr.mxu0 0.0
    %995 = vmatpush1.msra.mxu0 0.0
    %996 = vmatprep.subr.mxu0 0.0
    %997 = vmatpush1.msra.mxu0 0.0
    %998 = vmatprep.subr.mxu0 0.0
    %999 = vmatpush1.msra.mxu0 0.0
    %1000 = vmatprep.subr.mxu0 0.0
    %1001 = vmatpush1.msra.mxu0 0.0
    %1002 = vmatprep.subr.mxu0 0.0
    %1003 = vmatpush1.msra.mxu0 0.0
    %1004 = vmatprep.subr.mxu0 0.0
    %1005 = vmatpush1.msra.mxu0 0.0
    %1006 = vmatprep.subr.mxu0 0.0
    %1007 = vmatpush1.msra.mxu0 0.0
    %1008 = vmatprep.subr.mxu0 0.0
    %1009 = vmatpush1.msra.mxu0 0.0
    %1010 = vmatprep.subr.mxu0 0.0
    %1011 = vmatpush1.msra.mxu0 0.0
    %1012 = vmatprep.subr.mxu0 0.0
    %1013 = vmatpush1.msra.mxu0 0.0
    %1014 = vmatprep.subr.mxu0 0.0
    %1015 = vmatpush1.msra.mxu0 0.0
    %1016 = vmatprep.subr.mxu0 0.0
    %1017 = vmatpush1.msra.mxu0 0.0
    %1018 = vmatprep.mubr.f32.mxu0 0.0
    %1019 = vmatmul.mubr.f32.gmra.mrb[0].mxu0 %v943
    %v1020 = vpop.f32.mrb[0].mxu0
    %v1021 = vadd.f32 %v940, %v1020
    %v1022 = vpop.f32.mrb[0].mxu0
    %1023 = vmatprep.mubr.f32.mxu0 0.0
    %1024 = vmatmul.mubr.f32.gmra.mrb[0].mxu0 %v946
    %v1025 = vpop.f32.mrb[0].mxu0
    %v1026 = vadd.f32 %v940, %v1025
    %v1027 = vpop.f32.mrb[0].mxu0
    %1028 = vmatprep.mubr.f32.mxu0 0.0
    %1029 = vmatmul.mubr.f32.gmra.mrb[0].mxu0 %v949
    %v1030 = vpop.f32.mrb[0].mxu0
    %v1031 = vadd.f32 %v940, %v1030
    %v1032 = vpop.f32.mrb[0].mxu0
    %1033 = vmatprep.mubr.f32.mxu0 0.0
    %1034 = vmatmul.mubr.f32.gmra.mrb[0].mxu0 %v952
    %v1035 = vpop.f32.mrb[0].mxu0
    %v1036 = vadd.f32 %v940, %v1035
    %v1037 = vpop.f32.mrb[0].mxu0
    %1038 = vdwg.mxu0
    %v1039 = vmax.f32 %v1021, 0.0
    %v1040 = vmax.f32 %v1026, 0.0
    %v1041 = vmax.f32 %v1031, 0.0
    %v1042 = vmax.f32 %v1036, 0.0
    %v1043 = vadd.f32 %v1039, %v927
    %v1044 = vadd.f32 %v1040, %v928
    %v1045 = vadd.f32 %v1041, %v929
    %v1046 = vadd.f32 %v1042, %v930
    %v1047 = vld [vmem:[%s14] sm:$0xff]
    %v1048 = vld [vmem:[%s14 + $0x8] sm:$0xff]
    %v1049 = vld [vmem:[%s14 + $0x10] sm:$0xff]
    %v1050 = vld [vmem:[%s14 + $0x18] sm:$0xff]
    %v1051 = vld [vmem:[%s15] sm:$0x1]
    %v1053 = vlaneseq
    %v1054 = vshrl.u32 %v1053, 7
    %v1055 = vsub.s32 0, %v1054
    %v1056 = vrot.slane %v1051, %v1055
    %v1059 = vsel %vm146, %v1043, 0
    %v1062 = vsel %vm146, %v1044, 0
    %v1065 = vsel %vm146, %v1045, 0
    %v1068 = vsel %vm146, %v1046, 0
    %1070 = vmatprep.subr.mxu0 0.0
    %1071 = vmatpush1.msra.mxu0 %v1047
    %1072 = vmatprep.subr.mxu0 0.0
    %1073 = vmatpush1.msra.mxu0 %v1048
    %1074 = vmatprep.subr.mxu0 0.0
    %1075 = vmatpush1.msra.mxu0 %v1049
    %1076 = vmatprep.subr.mxu0 0.0
    %1077 = vmatpush1.msra.mxu0 %v1050
    %1078 = vmatprep.subr.mxu0 0.0
    %1079 = vmatpush1.msra.mxu0 0.0
    %1080 = vmatprep.subr.mxu0 0.0
    %1081 = vmatpush1.msra.mxu0 0.0
    %1082 = vmatprep.subr.mxu0 0.0
    %1083 = vmatpush1.msra.mxu0 0.0
    %1084 = vmatprep.subr.mxu0 0.0
    %1085 = vmatpush1.msra.mxu0 0.0
    %1086 = vmatprep.subr.mxu0 0.0
    %1087 = vmatpush1.msra.mxu0 0.0
    %1088 = vmatprep.subr.mxu0 0.0
    %1089 = vmatpush1.msra.mxu0 0.0
    %1090 = vmatprep.subr.mxu0 0.0
    %1091 = vmatpush1.msra.mxu0 0.0
    %1092 = vmatprep.subr.mxu0 0.0
    %1093 = vmatpush1.msra.mxu0 0.0
    %1094 = vmatprep.subr.mxu0 0.0
    %1095 = vmatpush1.msra.mxu0 0.0
    %1096 = vmatprep.subr.mxu0 0.0
    %1097 = vmatpush1.msra.mxu0 0.0
    %1098 = vmatprep.subr.mxu0 0.0
    %1099 = vmatpush1.msra.mxu0 0.0
    %1100 = vmatprep.subr.mxu0 0.0
    %1101 = vmatpush1.msra.mxu0 0.0
    %1102 = vmatprep.subr.mxu0 0.0
    %1103 = vmatpush1.msra.mxu0 0.0
    %1104 = vmatprep.subr.mxu0 0.0
    %1105 = vmatpush1.msra.mxu0 0.0
    %1106 = vmatprep.subr.mxu0 0.0
    %1107 = vmatpush1.msra.mxu0 0.0
    %1108 = vmatprep.subr.mxu0 0.0
    %1109 = vmatpush1.msra.mxu0 0.0
    %1110 = vmatprep.subr.mxu0 0.0
    %1111 = vmatpush1.msra.mxu0 0.0
    %1112 = vmatprep.subr.mxu0 0.0
    %1113 = vmatpush1.msra.mxu0 0.0
    %1114 = vmatprep.subr.mxu0 0.0
    %1115 = vmatpush1.msra.mxu0 0.0
    %1116 = vmatprep.subr.mxu0 0.0
    %1117 = vmatpush1.msra.mxu0 0.0
    %1118 = vmatprep.subr.mxu0 0.0
    %1119 = vmatpush1.msra.mxu0 0.0
    %1120 = vmatprep.subr.mxu0 0.0
    %1121 = vmatpush1.msra.mxu0 0.0
    %1122 = vmatprep.subr.mxu0 0.0
    %1123 = vmatpush1.msra.mxu0 0.0
    %1124 = vmatprep.subr.mxu0 0.0
    %1125 = vmatpush1.msra.mxu0 0.0
    %1126 = vmatprep.subr.mxu0 0.0
    %1127 = vmatpush1.msra.mxu0 0.0
    %1128 = vmatprep.subr.mxu0 0.0
    %1129 = vmatpush1.msra.mxu0 0.0
    %1130 = vmatprep.subr.mxu0 0.0
    %1131 = vmatpush1.msra.mxu0 0.0
    %1132 = vmatprep.subr.mxu0 0.0
    %1133 = vmatpush1.msra.mxu0 0.0
    %1134 = vmatprep.mubr.f32.mxu0 0.0
    %1135 = vmatmul.mubr.f32.gmra.mrb[0].mxu0 %v1059
    %v1136 = vpop.f32.mrb[0].mxu0
    %v1137 = vadd.f32 %v1056, %v1136
    %v1138 = vpop.f32.mrb[0].mxu0
    %1139 = vmatprep.mubr.f32.mxu0 0.0
    %1140 = vmatmul.mubr.f32.gmra.mrb[0].mxu0 %v1062
    %v1141 = vpop.f32.mrb[0].mxu0
    %v1142 = vadd.f32 %v1056, %v1141
    %v1143 = vpop.f32.mrb[0].mxu0
    %1144 = vmatprep.mubr.f32.mxu0 0.0
    %1145 = vmatmul.mubr.f32.gmra.mrb[0].mxu0 %v1065
    %v1146 = vpop.f32.mrb[0].mxu0
    %v1147 = vadd.f32 %v1056, %v1146
    %v1148 = vpop.f32.mrb[0].mxu0
    %1149 = vmatprep.mubr.f32.mxu0 0.0
    %1150 = vmatmul.mubr.f32.gmra.mrb[0].mxu0 %v1068
    %v1151 = vpop.f32.mrb[0].mxu0
    %v1152 = vadd.f32 %v1056, %v1151
    %v1153 = vpop.f32.mrb[0].mxu0
    %1154 = vdwg.mxu0
    %v1155 = vmax.f32 %v1137, 0.0
    %v1156 = vmax.f32 %v1142, 0.0
    %v1157 = vmax.f32 %v1147, 0.0
    %v1158 = vmax.f32 %v1152, 0.0
    %v1159 = vadd.f32 %v1155, %v1043
    %v1160 = vadd.f32 %v1156, %v1044
    %v1161 = vadd.f32 %v1157, %v1045
    %v1162 = vadd.f32 %v1158, %v1046
    %v1163 = vld [vmem:[%s16] sm:$0xff]
    %v1164 = vld [vmem:[%s16 + $0x8] sm:$0xff]
    %v1165 = vld [vmem:[%s16 + $0x10] sm:$0xff]
    %v1166 = vld [vmem:[%s16 + $0x18] sm:$0xff]
    %v1167 = vld [vmem:[%s17] sm:$0x1]
    %v1169 = vlaneseq
    %v1170 = vshrl.u32 %v1169, 7
    %v1171 = vsub.s32 0, %v1170
    %v1172 = vrot.slane %v1167, %v1171
    %v1175 = vsel %vm146, %v1159, 0
    %v1178 = vsel %vm146, %v1160, 0
    %v1181 = vsel %vm146, %v1161, 0
    %v1184 = vsel %vm146, %v1162, 0
    %1186 = vmatprep.subr.mxu0 0.0
    %1187 = vmatpush1.msra.mxu0 %v1163
    %1188 = vmatprep.subr.mxu0 0.0
    %1189 = vmatpush1.msra.mxu0 %v1164
    %1190 = vmatprep.subr.mxu0 0.0
    %1191 = vmatpush1.msra.mxu0 %v1165
    %1192 = vmatprep.subr.mxu0 0.0
    %1193 = vmatpush1.msra.mxu0 %v1166
    %1194 = vmatprep.subr.mxu0 0.0
    %1195 = vmatpush1.msra.mxu0 0.0
    %1196 = vmatprep.subr.mxu0 0.0
    %1197 = vmatpush1.msra.mxu0 0.0
    %1198 = vmatprep.subr.mxu0 0.0
    %1199 = vmatpush1.msra.mxu0 0.0
    %1200 = vmatprep.subr.mxu0 0.0
    %1201 = vmatpush1.msra.mxu0 0.0
    %1202 = vmatprep.subr.mxu0 0.0
    %1203 = vmatpush1.msra.mxu0 0.0
    %1204 = vmatprep.subr.mxu0 0.0
    %1205 = vmatpush1.msra.mxu0 0.0
    %1206 = vmatprep.subr.mxu0 0.0
    %1207 = vmatpush1.msra.mxu0 0.0
    %1208 = vmatprep.subr.mxu0 0.0
    %1209 = vmatpush1.msra.mxu0 0.0
    %1210 = vmatprep.subr.mxu0 0.0
    %1211 = vmatpush1.msra.mxu0 0.0
    %1212 = vmatprep.subr.mxu0 0.0
    %1213 = vmatpush1.msra.mxu0 0.0
    %1214 = vmatprep.subr.mxu0 0.0
    %1215 = vmatpush1.msra.mxu0 0.0
    %1216 = vmatprep.subr.mxu0 0.0
    %1217 = vmatpush1.msra.mxu0 0.0
    %1218 = vmatprep.subr.mxu0 0.0
    %1219 = vmatpush1.msra.mxu0 0.0
    %1220 = vmatprep.subr.mxu0 0.0
    %1221 = vmatpush1.msra.mxu0 0.0
    %1222 = vmatprep.subr.mxu0 0.0
    %1223 = vmatpush1.msra.mxu0 0.0
    %1224 = vmatprep.subr.mxu0 0.0
    %1225 = vmatpush1.msra.mxu0 0.0
    %1226 = vmatprep.subr.mxu0 0.0
    %1227 = vmatpush1.msra.mxu0 0.0
    %1228 = vmatprep.subr.mxu0 0.0
    %1229 = vmatpush1.msra.mxu0 0.0
    %1230 = vmatprep.subr.mxu0 0.0
    %1231 = vmatpush1.msra.mxu0 0.0
    %1232 = vmatprep.subr.mxu0 0.0
    %1233 = vmatpush1.msra.mxu0 0.0
    %1234 = vmatprep.subr.mxu0 0.0
    %1235 = vmatpush1.msra.mxu0 0.0
    %1236 = vmatprep.subr.mxu0 0.0
    %1237 = vmatpush1.msra.mxu0 0.0
    %1238 = vmatprep.subr.mxu0 0.0
    %1239 = vmatpush1.msra.mxu0 0.0
    %1240 = vmatprep.subr.mxu0 0.0
    %1241 = vmatpush1.msra.mxu0 0.0
    %1242 = vmatprep.subr.mxu0 0.0
    %1243 = vmatpush1.msra.mxu0 0.0
    %1244 = vmatprep.subr.mxu0 0.0
    %1245 = vmatpush1.msra.mxu0 0.0
    %1246 = vmatprep.subr.mxu0 0.0
    %1247 = vmatpush1.msra.mxu0 0.0
    %1248 = vmatprep.subr.mxu0 0.0
    %1249 = vmatpush1.msra.mxu0 0.0
    %1250 = vmatprep.mubr.f32.mxu0 0.0
    %1251 = vmatmul.mubr.f32.gmra.mrb[0].mxu0 %v1175
    %v1252 = vpop.f32.mrb[0].mxu0
    %v1253 = vadd.f32 %v1172, %v1252
    %v1254 = vpop.f32.mrb[0].mxu0
    %1255 = vmatprep.mubr.f32.mxu0 0.0
    %1256 = vmatmul.mubr.f32.gmra.mrb[0].mxu0 %v1178
    %v1257 = vpop.f32.mrb[0].mxu0
    %v1258 = vadd.f32 %v1172, %v1257
    %v1259 = vpop.f32.mrb[0].mxu0
    %1260 = vmatprep.mubr.f32.mxu0 0.0
    %1261 = vmatmul.mubr.f32.gmra.mrb[0].mxu0 %v1181
    %v1262 = vpop.f32.mrb[0].mxu0
    %v1263 = vadd.f32 %v1172, %v1262
    %v1264 = vpop.f32.mrb[0].mxu0
    %1265 = vmatprep.mubr.f32.mxu0 0.0
    %1266 = vmatmul.mubr.f32.gmra.mrb[0].mxu0 %v1184
    %v1267 = vpop.f32.mrb[0].mxu0
    %v1268 = vadd.f32 %v1172, %v1267
    %v1269 = vpop.f32.mrb[0].mxu0
    %1270 = vdwg.mxu0
    %v1271 = vmax.f32 %v1253, 0.0
    %v1272 = vmax.f32 %v1258, 0.0
    %v1273 = vmax.f32 %v1263, 0.0
    %v1274 = vmax.f32 %v1268, 0.0
    %v1275 = vadd.f32 %v1271, %v1159
    %v1276 = vadd.f32 %v1272, %v1160
    %v1277 = vadd.f32 %v1273, %v1161
    %v1278 = vadd.f32 %v1274, %v1162
    %v1279 = vld [vmem:[%s18] sm:$0xff]
    %v1280 = vld [vmem:[%s18 + $0x8] sm:$0xff]
    %v1281 = vld [vmem:[%s18 + $0x10] sm:$0xff]
    %v1282 = vld [vmem:[%s18 + $0x18] sm:$0xff]
    %v1283 = vld [vmem:[%s19] sm:$0x1]
    %v1285 = vlaneseq
    %v1286 = vshrl.u32 %v1285, 7
    %v1287 = vsub.s32 0, %v1286
    %v1288 = vrot.slane %v1283, %v1287
    %v1291 = vsel %vm146, %v1275, 0
    %v1294 = vsel %vm146, %v1276, 0
    %v1297 = vsel %vm146, %v1277, 0
    %v1300 = vsel %vm146, %v1278, 0
    %1302 = vmatprep.subr.mxu0 0.0
    %1303 = vmatpush1.msra.mxu0 %v1279
    %1304 = vmatprep.subr.mxu0 0.0
    %1305 = vmatpush1.msra.mxu0 %v1280
    %1306 = vmatprep.subr.mxu0 0.0
    %1307 = vmatpush1.msra.mxu0 %v1281
    %1308 = vmatprep.subr.mxu0 0.0
    %1309 = vmatpush1.msra.mxu0 %v1282
    %1310 = vmatprep.subr.mxu0 0.0
    %1311 = vmatpush1.msra.mxu0 0.0
    %1312 = vmatprep.subr.mxu0 0.0
    %1313 = vmatpush1.msra.mxu0 0.0
    %1314 = vmatprep.subr.mxu0 0.0
    %1315 = vmatpush1.msra.mxu0 0.0
    %1316 = vmatprep.subr.mxu0 0.0
    %1317 = vmatpush1.msra.mxu0 0.0
    %1318 = vmatprep.subr.mxu0 0.0
    %1319 = vmatpush1.msra.mxu0 0.0
    %1320 = vmatprep.subr.mxu0 0.0
    %1321 = vmatpush1.msra.mxu0 0.0
    %1322 = vmatprep.subr.mxu0 0.0
    %1323 = vmatpush1.msra.mxu0 0.0
    %1324 = vmatprep.subr.mxu0 0.0
    %1325 = vmatpush1.msra.mxu0 0.0
    %1326 = vmatprep.subr.mxu0 0.0
    %1327 = vmatpush1.msra.mxu0 0.0
    %1328 = vmatprep.subr.mxu0 0.0
    %1329 = vmatpush1.msra.mxu0 0.0
    %1330 = vmatprep.subr.mxu0 0.0
    %1331 = vmatpush1.msra.mxu0 0.0
    %1332 = vmatprep.subr.mxu0 0.0
    %1333 = vmatpush1.msra.mxu0 0.0
    %1334 = vmatprep.subr.mxu0 0.0
    %1335 = vmatpush1.msra.mxu0 0.0
    %1336 = vmatprep.subr.mxu0 0.0
    %1337 = vmatpush1.msra.mxu0 0.0
    %1338 = vmatprep.subr.mxu0 0.0
    %1339 = vmatpush1.msra.mxu0 0.0
    %1340 = vmatprep.subr.mxu0 0.0
    %1341 = vmatpush1.msra.mxu0 0.0
    %1342 = vmatprep.subr.mxu0 0.0
    %1343 = vmatpush1.msra.mxu0 0.0
    %1344 = vmatprep.subr.mxu0 0.0
    %1345 = vmatpush1.msra.mxu0 0.0
    %1346 = vmatprep.subr.mxu0 0.0
    %1347 = vmatpush1.msra.mxu0 0.0
    %1348 = vmatprep.subr.mxu0 0.0
    %1349 = vmatpush1.msra.mxu0 0.0
    %1350 = vmatprep.subr.mxu0 0.0
    %1351 = vmatpush1.msra.mxu0 0.0
    %1352 = vmatprep.subr.mxu0 0.0
    %1353 = vmatpush1.msra.mxu0 0.0
    %1354 = vmatprep.subr.mxu0 0.0
    %1355 = vmatpush1.msra.mxu0 0.0
    %1356 = vmatprep.subr.mxu0 0.0
    %1357 = vmatpush1.msra.mxu0 0.0
    %1358 = vmatprep.subr.mxu0 0.0
    %1359 = vmatpush1.msra.mxu0 0.0
    %1360 = vmatprep.subr.mxu0 0.0
    %1361 = vmatpush1.msra.mxu0 0.0
    %1362 = vmatprep.subr.mxu0 0.0
    %1363 = vmatpush1.msra.mxu0 0.0
    %1364 = vmatprep.subr.mxu0 0.0
    %1365 = vmatpush1.msra.mxu0 0.0
    %1366 = vmatprep.mubr.f32.mxu0 0.0
    %1367 = vmatmul.mubr.f32.gmra.mrb[0].mxu0 %v1291
    %v1368 = vpop.f32.mrb[0].mxu0
    %v1369 = vadd.f32 %v1288, %v1368
    %v1370 = vpop.f32.mrb[0].mxu0
    %1371 = vmatprep.mubr.f32.mxu0 0.0
    %1372 = vmatmul.mubr.f32.gmra.mrb[0].mxu0 %v1294
    %v1373 = vpop.f32.mrb[0].mxu0
    %v1374 = vadd.f32 %v1288, %v1373
    %v1375 = vpop.f32.mrb[0].mxu0
    %1376 = vmatprep.mubr.f32.mxu0 0.0
    %1377 = vmatmul.mubr.f32.gmra.mrb[0].mxu0 %v1297
    %v1378 = vpop.f32.mrb[0].mxu0
    %v1379 = vadd.f32 %v1288, %v1378
    %v1380 = vpop.f32.mrb[0].mxu0
    %1381 = vmatprep.mubr.f32.mxu0 0.0
    %1382 = vmatmul.mubr.f32.gmra.mrb[0].mxu0 %v1300
    %v1383 = vpop.f32.mrb[0].mxu0
    %v1384 = vadd.f32 %v1288, %v1383
    %v1385 = vpop.f32.mrb[0].mxu0
    %1386 = vdwg.mxu0
    %v1387 = vmax.f32 %v1369, 0.0
    %v1388 = vmax.f32 %v1374, 0.0
    %v1389 = vmax.f32 %v1379, 0.0
    %v1390 = vmax.f32 %v1384, 0.0
    %v1391 = vadd.f32 %v1387, %v1275
    %v1392 = vadd.f32 %v1388, %v1276
    %v1393 = vadd.f32 %v1389, %v1277
    %v1394 = vadd.f32 %v1390, %v1278
    %v1395 = vld [vmem:[%s20] sm:$0xff]
    %v1396 = vld [vmem:[%s20 + $0x8] sm:$0xff]
    %v1397 = vld [vmem:[%s20 + $0x10] sm:$0xff]
    %v1398 = vld [vmem:[%s20 + $0x18] sm:$0xff]
    %v1399 = vld [vmem:[%s21] sm:$0x1]
    %v1401 = vlaneseq
    %v1402 = vshrl.u32 %v1401, 7
    %v1403 = vsub.s32 0, %v1402
    %v1404 = vrot.slane %v1399, %v1403
    %v1407 = vsel %vm146, %v1391, 0
    %v1410 = vsel %vm146, %v1392, 0
    %v1413 = vsel %vm146, %v1393, 0
    %v1416 = vsel %vm146, %v1394, 0
    %1418 = vmatprep.subr.mxu0 0.0
    %1419 = vmatpush1.msra.mxu0 %v1395
    %1420 = vmatprep.subr.mxu0 0.0
    %1421 = vmatpush1.msra.mxu0 %v1396
    %1422 = vmatprep.subr.mxu0 0.0
    %1423 = vmatpush1.msra.mxu0 %v1397
    %1424 = vmatprep.subr.mxu0 0.0
    %1425 = vmatpush1.msra.mxu0 %v1398
    %1426 = vmatprep.subr.mxu0 0.0
    %1427 = vmatpush1.msra.mxu0 0.0
    %1428 = vmatprep.subr.mxu0 0.0
    %1429 = vmatpush1.msra.mxu0 0.0
    %1430 = vmatprep.subr.mxu0 0.0
    %1431 = vmatpush1.msra.mxu0 0.0
    %1432 = vmatprep.subr.mxu0 0.0
    %1433 = vmatpush1.msra.mxu0 0.0
    %1434 = vmatprep.subr.mxu0 0.0
    %1435 = vmatpush1.msra.mxu0 0.0
    %1436 = vmatprep.subr.mxu0 0.0
    %1437 = vmatpush1.msra.mxu0 0.0
    %1438 = vmatprep.subr.mxu0 0.0
    %1439 = vmatpush1.msra.mxu0 0.0
    %1440 = vmatprep.subr.mxu0 0.0
    %1441 = vmatpush1.msra.mxu0 0.0
    %1442 = vmatprep.subr.mxu0 0.0
    %1443 = vmatpush1.msra.mxu0 0.0
    %1444 = vmatprep.subr.mxu0 0.0
    %1445 = vmatpush1.msra.mxu0 0.0
    %1446 = vmatprep.subr.mxu0 0.0
    %1447 = vmatpush1.msra.mxu0 0.0
    %1448 = vmatprep.subr.mxu0 0.0
    %1449 = vmatpush1.msra.mxu0 0.0
    %1450 = vmatprep.subr.mxu0 0.0
    %1451 = vmatpush1.msra.mxu0 0.0
    %1452 = vmatprep.subr.mxu0 0.0
    %1453 = vmatpush1.msra.mxu0 0.0
    %1454 = vmatprep.subr.mxu0 0.0
    %1455 = vmatpush1.msra.mxu0 0.0
    %1456 = vmatprep.subr.mxu0 0.0
    %1457 = vmatpush1.msra.mxu0 0.0
    %1458 = vmatprep.subr.mxu0 0.0
    %1459 = vmatpush1.msra.mxu0 0.0
    %1460 = vmatprep.subr.mxu0 0.0
    %1461 = vmatpush1.msra.mxu0 0.0
    %1462 = vmatprep.subr.mxu0 0.0
    %1463 = vmatpush1.msra.mxu0 0.0
    %1464 = vmatprep.subr.mxu0 0.0
    %1465 = vmatpush1.msra.mxu0 0.0
    %1466 = vmatprep.subr.mxu0 0.0
    %1467 = vmatpush1.msra.mxu0 0.0
    %1468 = vmatprep.subr.mxu0 0.0
    %1469 = vmatpush1.msra.mxu0 0.0
    %1470 = vmatprep.subr.mxu0 0.0
    %1471 = vmatpush1.msra.mxu0 0.0
    %1472 = vmatprep.subr.mxu0 0.0
    %1473 = vmatpush1.msra.mxu0 0.0
    %1474 = vmatprep.subr.mxu0 0.0
    %1475 = vmatpush1.msra.mxu0 0.0
    %1476 = vmatprep.subr.mxu0 0.0
    %1477 = vmatpush1.msra.mxu0 0.0
    %1478 = vmatprep.subr.mxu0 0.0
    %1479 = vmatpush1.msra.mxu0 0.0
    %1480 = vmatprep.subr.mxu0 0.0
    %1481 = vmatpush1.msra.mxu0 0.0
    %1482 = vmatprep.mubr.f32.mxu0 0.0
    %1483 = vmatmul.mubr.f32.gmra.mrb[0].mxu0 %v1407
    %v1484 = vpop.f32.mrb[0].mxu0
    %v1485 = vadd.f32 %v1404, %v1484
    %v1486 = vpop.f32.mrb[0].mxu0
    %1487 = vmatprep.mubr.f32.mxu0 0.0
    %1488 = vmatmul.mubr.f32.gmra.mrb[0].mxu0 %v1410
    %v1489 = vpop.f32.mrb[0].mxu0
    %v1490 = vadd.f32 %v1404, %v1489
    %v1491 = vpop.f32.mrb[0].mxu0
    %1492 = vmatprep.mubr.f32.mxu0 0.0
    %1493 = vmatmul.mubr.f32.gmra.mrb[0].mxu0 %v1413
    %v1494 = vpop.f32.mrb[0].mxu0
    %v1495 = vadd.f32 %v1404, %v1494
    %v1496 = vpop.f32.mrb[0].mxu0
    %1497 = vmatprep.mubr.f32.mxu0 0.0
    %1498 = vmatmul.mubr.f32.gmra.mrb[0].mxu0 %v1416
    %v1499 = vpop.f32.mrb[0].mxu0
    %v1500 = vadd.f32 %v1404, %v1499
    %v1501 = vpop.f32.mrb[0].mxu0
    %1502 = vdwg.mxu0
    %v1503 = vlaneseq
    %v1504 = vand.u32 %v1503, 127
    %vm1505 = vcmp.ge.s32.totalorder %v1504, 16
    %vm1506 = vcmp.lt.s32.totalorder %v1504, 32
    %vm1507 = vmand %vm1505, %vm1506
    %v1508 = vmax.f32 %v1485, -5.0
    %v1509 = vmax.f32 %v1490, -5.0
    %v1510 = vmax.f32 %v1495, -5.0
    %v1511 = vmax.f32 %v1500, -5.0
    %v1512 = vmin.f32 %v1508, 5.0
    %v1513 = vmin.f32 %v1509, 5.0
    %v1514 = vmin.f32 %v1510, 5.0
    %v1515 = vmin.f32 %v1511, 5.0
    %v1516 = vsel %vm1507, %v1512, %v1485
    %v1517 = vsel %vm1507, %v1513, %v1490
    %v1518 = vsel %vm1507, %v1514, %v1495
    %v1519 = vsel %vm1507, %v1515, %v1500
    %1522 = vrot.lane.b32.xlu0 %v1518, 64
    %v1523 = vpop.permute.xlu0 %1522
    %1524 = vrot.lane.b32.xlu0 %v1519, 64
    %v1525 = vpop.permute.xlu0 %1524
    %v1528 = vsel %vm276, %v1516, %v1523
    %v1529 = vsel %vm276, %v1517, %v1525
    %1530 = vst [vmem:[#allocation2] sm:$0xff] %v1528
    %1531 = vst [vmem:[#allocation2 + $0x8] sm:$0xff] %v1529
    // Predicated region
    $region90: #{tpu_custom_call.1} parent=1 // pred_check
      _
    $region91: #{tpu_custom_call.1} parent=1 // pred_check_branch
      %1533 = sbr.rel (0) target = $region93
    $region92: #{tpu_custom_call.1} parent=1 // pred_region
      %s1535 = ssub.s32 256, 256
      %1536 = vsyncadd [#allocation3], %s1535
      %s1537 = sshll.u32 [#allocation2], 4
      %s1538 = int_to_ptr.vmem [resolvable:$true] %s1537
      %1543 = dma.vmem_to_hbm [thread:$0]  %s1538, 256, %s22, [#allocation3], 128, 128, 8
    $region93: #{tpu_custom_call.1} parent=1 // pred_fallthru
      _
    // Predicated region
    $region94: #{tpu_custom_call.1} parent=1 // pred_check
      _
    $region95: #{tpu_custom_call.1} parent=1 // pred_check_branch
      %1545 = sbr.rel (0) target = $region97
    $region96: #{tpu_custom_call.1} parent=1 // pred_region
      %1546 = dma.done [#allocation3], 256
    $region97: #{tpu_custom_call.1} parent=1 // pred_fallthru
      _
    %1547 = vsyncpa [#allocation3], 1

</llo_original>
